<compile_context>
chip_gen: v7x
topology: tpu7x:2x2x1
jax: 0.10.0
libtpu: 0.0.40
codegen_flags: <defaults>
</compile_context>

<pallas_src>
import jax
import jax.numpy as jnp
from jax import lax
from jax.experimental import pallas as pl
from jax.experimental.pallas import tpu as pltpu

H_BERT = 768      # BERT hidden size (pooled output width)
H1 = 256          # fc1 out
H2 = 64           # fc2 out
LANE = 128        # TPU lane width


def ranking_head_kernel(q_ref, d_ref,
                        w1q_ref, w1d_ref, b1_ref,
                        w2_ref, b2_ref,
                        w3_ref, b3_ref,
                        out_ref):
    """Fused MLP ranking head; activations arrive bf16 [TB, 768], batch->lanes."""
    # dropout(p=0.1) is identity in eval mode.
    # Contract W's in-dim (axis 1) with the activation feature dim (axis 1):
    # [H1, 768] x [TB, 768] -> [H1, TB]  (lane-dense, no transposes needed).
    dn = (((1,), (1,)), ((), ()))

    # fc1 on concat([q, d]):  W1 @ [q; d] == W1q @ q + W1d @ d    -> [256, TB]
    h1 = (lax.dot_general(w1q_ref[...], q_ref[...], dn,
                          preferred_element_type=jnp.float32)
          + lax.dot_general(w1d_ref[...], d_ref[...], dn,
                            preferred_element_type=jnp.float32)
          + b1_ref[...])
    h1 = jnp.maximum(h1, 0.0)                        # ReLU (f32 epilogue)

    # fc2 -> [64, TB]
    h2 = (jnp.dot(w2_ref[...], h1.astype(jnp.bfloat16),
                  preferred_element_type=jnp.float32)
          + b2_ref[...])
    h2 = jnp.maximum(h2, 0.0)                        # ReLU

    # fc3: Linear(64, 1) as VPU multiply + sublane reduce -> [1, TB]
    scores = jnp.sum(h2 * w3_ref[...], axis=0, keepdims=True) + b3_ref[...]
    out_ref[...] = scores.astype(out_ref.dtype)


def _select_batch_tile(B, tb):
    """Pick (TB, nb, B_pad): lane-dense tiles, >=2 grid steps when affordable."""
    tb = max(LANE, (tb // LANE) * LANE)
    B_lane = pl.cdiv(B, LANE) * LANE                 # pad to full lanes
    if B_lane <= tb:
        # Moderate batch: split into 2 tiles (multiples of 256) when possible so
        # the "parallel" axis actually shards across both v7x TensorCores.
        half = ((B_lane // 2) // 256) * 256
        TB = half if half >= 256 else B_lane
    else:
        TB = tb
    nb = pl.cdiv(B_lane, TB)
    return TB, nb, nb * TB


def bert_ranking_head(q_pooled, d_pooled, params, *, tb=1024):
    """q_pooled, d_pooled: [B, 768] pooled BERT outputs.  Returns [B] scores."""
    B = q_pooled.shape[0]
    w1q, w1d, b1, w2, b2, w3, b3 = params

    TB, nb, B_pad = _select_batch_tile(B, tb)

    # Ship activations as bf16 (halves the dominant DMA + the pad's write bytes).
    q = q_pooled.astype(jnp.bfloat16)
    d = d_pooled.astype(jnp.bfloat16)
    if B_pad != B:
        pad = ((0, B_pad - B), (0, 0))
        q = jnp.pad(q, pad)
        d = jnp.pad(d, pad)

    # Weights stay VMEM-resident across all grid steps (constant index_map).
    resident = lambda shape: pl.BlockSpec(shape, lambda i: (0, 0))
    # Activation tiles: double-buffered by default; bump to pl.Buffered(3) only
    # if xprof shows exposed DMA waits.
    act_spec = pl.BlockSpec((TB, H_BERT), lambda i: (i, 0))

    flops = 2 * B_pad * (2 * H_BERT * H1 + H1 * H2 + H2)
    bytes_accessed = ((w1q.size + w1d.size + w2.size) * 2       # bf16 weights
                      + (b1.size + b2.size + w3.size + b3.size) * 4
                      + (q.size + d.size) * 2                    # bf16 activations
                      + B_pad * 4)                               # f32 scores

    # VMEM budget: 2 acts x 2 buffers x TB x 768 bf16 + ~1 MB weights + f32
    # intermediates; set explicitly so double-buffering survives on v5e's
    # 16 MiB scoped default and within v7x's 64 MiB physical VMEM.
    vmem_bytes = min(32 * 1024 * 1024,
                     8 * 1024 * 1024 + 2 * 2 * TB * H_BERT * 2)

    out = pl.pallas_call(
        ranking_head_kernel,
        out_shape=jax.ShapeDtypeStruct((1, B_pad), jnp.float32),
        grid=(nb,),
        in_specs=[
            act_spec,                                 # q tile  [TB, 768] bf16
            act_spec,                                 # d tile  [TB, 768] bf16
            resident((H1, H_BERT)),                   # W1 query half (bf16)
            resident((H1, H_BERT)),                   # W1 doc half   (bf16)
            resident((H1, 1)),                        # b1
            resident((H2, H1)),                       # W2 (bf16)
            resident((H2, 1)),                        # b2
            resident((H2, 1)),                        # W3 as a column
            resident((1, 1)),                         # b3
        ],
        out_specs=pl.BlockSpec((1, TB), lambda i: (0, i)),
        compiler_params=pltpu.CompilerParams(
            dimension_semantics=("parallel",),
            vmem_limit_bytes=vmem_bytes),
        cost_estimate=pl.CostEstimate(
            flops=flops, transcendentals=0, bytes_accessed=bytes_accessed),
    )(q, d, w1q, w1d, b1, w2, b2, w3, b3)

    return out[0, :B]                                  # squeeze(-1) -> [B]


def init_params(key):
    """Deterministic init matching nn.Linear [out, in] shapes of the module."""
    k1, k2, k3, k4, k5, k6 = jax.random.split(key, 6)
    # fc1: Linear(1536, 256) — W stored [256, 1536]; split into q/d halves.
    w1 = jax.random.normal(k1, (H1, 2 * H_BERT), jnp.float32) * 0.02
    b1 = jax.random.normal(k4, (H1, 1), jnp.float32) * 0.02
    # fc2: Linear(256, 64)
    w2 = jax.random.normal(k2, (H2, H1), jnp.float32) * 0.02
    b2 = jax.random.normal(k5, (H2, 1), jnp.float32) * 0.02
    # fc3: Linear(64, 1) — kept as an f32 column for the sublane-reduce epilogue.
    w3 = jax.random.normal(k3, (H2, 1), jnp.float32) * 0.02
    b3 = jax.random.normal(k6, (1, 1), jnp.float32) * 0.02
    w1q = w1[:, :H_BERT].astype(jnp.bfloat16)          # bf16 shipped weights
    w1d = w1[:, H_BERT:].astype(jnp.bfloat16)
    w2 = w2.astype(jnp.bfloat16)
    return (w1q, w1d, b1, w2, b2, w3, b3)


if __name__ == "__main__":
    key = jax.random.PRNGKey(0)
    kp, kq, kd = jax.random.split(key, 3)

    B = 8
    # Stand-ins for the pooled BERT outputs of query / doc text.
    q_pooled = jax.random.normal(kq, (B, H_BERT), jnp.float32)
    d_pooled = jax.random.normal(kd, (B, H_BERT), jnp.float32)

    params = init_params(kp)

    scores = bert_ranking_head(q_pooled, d_pooled, params)
    jax.block_until_ready(scores)

    # Pure-JAX reference with the same (bf16-input, bf16-weight, f32-acc) math.
    w1q, w1d, b1, w2, b2, w3, b3 = params
    q_bf = q_pooled.astype(jnp.bfloat16)
    d_bf = d_pooled.astype(jnp.bfloat16)
    dn = (((1,), (1,)), ((), ()))
    h1 = (lax.dot_general(w1q, q_bf, dn, preferred_element_type=jnp.float32)
          + lax.dot_general(w1d, d_bf, dn, preferred_element_type=jnp.float32)
          + b1)
    h1 = jnp.maximum(h1, 0.0)
    h2 = (jnp.dot(w2, h1.astype(jnp.bfloat16),
                  preferred_element_type=jnp.float32) + b2)
    h2 = jnp.maximum(h2, 0.0)
    ref = jnp.sum(h2 * w3, axis=0) + b3[0, 0]

    assert scores.shape == (B,), scores.shape
    assert jnp.allclose(scores, ref, atol=1e-2, rtol=1e-2), (
        float(jnp.max(jnp.abs(scores - ref))))
    print("KERNEL_OK")
</pallas_src>

<mosaic_0001>
module attributes {stable_mosaic.version = 11 : i64} {
  func.func @ranking_head_kernel(%arg0: i32, %arg1: memref<128x768xbf16, #tpu.memory_space<vmem>>, %arg2: memref<128x768xbf16, #tpu.memory_space<vmem>>, %arg3: memref<256x768xbf16, #tpu.memory_space<vmem>>, %arg4: memref<256x768xbf16, #tpu.memory_space<vmem>>, %arg5: memref<256x1xf32, #tpu.memory_space<vmem>>, %arg6: memref<64x256xbf16, #tpu.memory_space<vmem>>, %arg7: memref<64x1xf32, #tpu.memory_space<vmem>>, %arg8: memref<64x1xf32, #tpu.memory_space<vmem>>, %arg9: memref<1x1xf32, #tpu.memory_space<vmem>>, %arg10: memref<1x128xf32, #tpu.memory_space<vmem>>) attributes {dimension_semantics = [#tpu.dimension_semantics<parallel>], iteration_bounds = array<i64: 1>, scalar_prefetch = 0 : i64, scratch_operands = 0 : i64, tpu.core_type = #tpu.core_type<tc>, window_params = [{transform_indices = @transform_0, window_bounds = array<i64: 128, 768>}, {transform_indices = @transform_1, window_bounds = array<i64: 128, 768>}, {pipeline_mode = #tpu.pipeline_mode<synchronous>, transform_indices = @transform_2, window_bounds = array<i64: 256, 768>}, {pipeline_mode = #tpu.pipeline_mode<synchronous>, transform_indices = @transform_3, window_bounds = array<i64: 256, 768>}, {pipeline_mode = #tpu.pipeline_mode<synchronous>, transform_indices = @transform_4, window_bounds = array<i64: 256, 1>}, {pipeline_mode = #tpu.pipeline_mode<synchronous>, transform_indices = @transform_5, window_bounds = array<i64: 64, 256>}, {pipeline_mode = #tpu.pipeline_mode<synchronous>, transform_indices = @transform_6, window_bounds = array<i64: 64, 1>}, {pipeline_mode = #tpu.pipeline_mode<synchronous>, transform_indices = @transform_7, window_bounds = array<i64: 64, 1>}, {pipeline_mode = #tpu.pipeline_mode<synchronous>, transform_indices = @transform_8, window_bounds = array<i64: 1, 1>}, {transform_indices = @transform_9, window_bounds = array<i64: 1, 128>}]} {
    %c0 = arith.constant 0 : index
    %c0_0 = arith.constant 0 : index
    %0 = vector.load %arg3[%c0, %c0_0] : memref<256x768xbf16, #tpu.memory_space<vmem>>, vector<256x768xbf16>
    %c0_1 = arith.constant 0 : index
    %c0_2 = arith.constant 0 : index
    %1 = vector.load %arg1[%c0_1, %c0_2] : memref<128x768xbf16, #tpu.memory_space<vmem>>, vector<128x768xbf16>
    %cst = arith.constant dense<0.000000e+00> : vector<256x128xf32>
    %2 = tpu.matmul %0, %1, %cst {dimension_numbers = #tpu.dot_dimension_numbers<[1], [1], [0], [0], [0, 0, 1, 0], [], []>} : vector<256x768xbf16>, vector<128x768xbf16>, vector<256x128xf32> -> vector<256x128xf32>
    %c0_3 = arith.constant 0 : index
    %c0_4 = arith.constant 0 : index
    %3 = vector.load %arg4[%c0_3, %c0_4] : memref<256x768xbf16, #tpu.memory_space<vmem>>, vector<256x768xbf16>
    %c0_5 = arith.constant 0 : index
    %c0_6 = arith.constant 0 : index
    %4 = vector.load %arg2[%c0_5, %c0_6] : memref<128x768xbf16, #tpu.memory_space<vmem>>, vector<128x768xbf16>
    %cst_7 = arith.constant dense<0.000000e+00> : vector<256x128xf32>
    %5 = tpu.matmul %3, %4, %cst_7 {dimension_numbers = #tpu.dot_dimension_numbers<[1], [1], [0], [0], [0, 0, 1, 0], [], []>} : vector<256x768xbf16>, vector<128x768xbf16>, vector<256x128xf32> -> vector<256x128xf32>
    %6 = arith.addf %2, %5 : vector<256x128xf32>
    %c0_8 = arith.constant 0 : index
    %c0_9 = arith.constant 0 : index
    %7 = vector.load %arg5[%c0_8, %c0_9] : memref<256x1xf32, #tpu.memory_space<vmem>>, vector<256x1xf32>
    %8 = vector.broadcast %7 : vector<256x1xf32> to vector<256x128xf32>
    %9 = arith.addf %6, %8 : vector<256x128xf32>
    %cst_10 = arith.constant 0.000000e+00 : f32
    %10 = vector.broadcast %cst_10 : f32 to vector<256x128xf32>
    %11 = arith.maximumf %9, %10 : vector<256x128xf32>
    %c0_11 = arith.constant 0 : index
    %c0_12 = arith.constant 0 : index
    %12 = vector.load %arg6[%c0_11, %c0_12] : memref<64x256xbf16, #tpu.memory_space<vmem>>, vector<64x256xbf16>
    %13 = arith.truncf %11 : vector<256x128xf32> to vector<256x128xbf16>
    %cst_13 = arith.constant dense<0.000000e+00> : vector<64x128xf32>
    %14 = tpu.matmul %12, %13, %cst_13 {dimension_numbers = #tpu.dot_dimension_numbers<[1], [0], [0], [1], [0, 0, 1, 1], [], []>} : vector<64x256xbf16>, vector<256x128xbf16>, vector<64x128xf32> -> vector<64x128xf32>
    %c0_14 = arith.constant 0 : index
    %c0_15 = arith.constant 0 : index
    %15 = vector.load %arg7[%c0_14, %c0_15] : memref<64x1xf32, #tpu.memory_space<vmem>>, vector<64x1xf32>
    %16 = vector.broadcast %15 : vector<64x1xf32> to vector<64x128xf32>
    %17 = arith.addf %14, %16 : vector<64x128xf32>
    %cst_16 = arith.constant 0.000000e+00 : f32
    %18 = vector.broadcast %cst_16 : f32 to vector<64x128xf32>
    %19 = arith.maximumf %17, %18 : vector<64x128xf32>
    %c0_17 = arith.constant 0 : index
    %c0_18 = arith.constant 0 : index
    %20 = vector.load %arg8[%c0_17, %c0_18] : memref<64x1xf32, #tpu.memory_space<vmem>>, vector<64x1xf32>
    %21 = vector.broadcast %20 : vector<64x1xf32> to vector<64x128xf32>
    %22 = arith.mulf %19, %21 : vector<64x128xf32>
    %cst_19 = arith.constant dense<0.000000e+00> : vector<128xf32>
    %23 = vector.multi_reduction <add>, %22, %cst_19 [0] : vector<64x128xf32> to vector<128xf32>
    %24 = vector.shape_cast %23 : vector<128xf32> to vector<1x128xf32>
    %c0_20 = arith.constant 0 : index
    %c0_21 = arith.constant 0 : index
    %25 = vector.load %arg9[%c0_20, %c0_21] : memref<1x1xf32, #tpu.memory_space<vmem>>, vector<1x1xf32>
    %26 = vector.broadcast %25 : vector<1x1xf32> to vector<1x128xf32>
    %27 = arith.addf %24, %26 : vector<1x128xf32>
    %c0_22 = arith.constant 0 : index
    %c0_23 = arith.constant 0 : index
    %28 = vector.load %arg10[%c0_22, %c0_23] : memref<1x128xf32, #tpu.memory_space<vmem>>, vector<1x128xf32>
    tpu.vector_store %arg10[%c0_22, %c0_23], %27 {strides = array<i32>} : memref<1x128xf32, #tpu.memory_space<vmem>>, vector<1x128xf32>,
    return
  }
  func.func @transform_0(%arg0: i32) -> (i32, i32) {
    %c0_i32 = arith.constant 0 : i32
    %c0_i32_0 = arith.constant 0 : i32
    return %arg0, %c0_i32 : i32, i32
  }
  func.func @transform_1(%arg0: i32) -> (i32, i32) {
    %c0_i32 = arith.constant 0 : i32
    %c0_i32_0 = arith.constant 0 : i32
    return %arg0, %c0_i32 : i32, i32
  }
  func.func @transform_2(%arg0: i32) -> (i32, i32) {
    %c0_i32 = arith.constant 0 : i32
    %c0_i32_0 = arith.constant 0 : i32
    %c0_i32_1 = arith.constant 0 : i32
    return %c0_i32, %c0_i32_0 : i32, i32
  }
  func.func @transform_3(%arg0: i32) -> (i32, i32) {
    %c0_i32 = arith.constant 0 : i32
    %c0_i32_0 = arith.constant 0 : i32
    %c0_i32_1 = arith.constant 0 : i32
    return %c0_i32, %c0_i32_0 : i32, i32
  }
  func.func @transform_4(%arg0: i32) -> (i32, i32) {
    %c0_i32 = arith.constant 0 : i32
    %c0_i32_0 = arith.constant 0 : i32
    %c0_i32_1 = arith.constant 0 : i32
    return %c0_i32, %c0_i32_0 : i32, i32
  }
  func.func @transform_5(%arg0: i32) -> (i32, i32) {
    %c0_i32 = arith.constant 0 : i32
    %c0_i32_0 = arith.constant 0 : i32
    %c0_i32_1 = arith.constant 0 : i32
    return %c0_i32, %c0_i32_0 : i32, i32
  }
  func.func @transform_6(%arg0: i32) -> (i32, i32) {
    %c0_i32 = arith.constant 0 : i32
    %c0_i32_0 = arith.constant 0 : i32
    %c0_i32_1 = arith.constant 0 : i32
    return %c0_i32, %c0_i32_0 : i32, i32
  }
  func.func @transform_7(%arg0: i32) -> (i32, i32) {
    %c0_i32 = arith.constant 0 : i32
    %c0_i32_0 = arith.constant 0 : i32
    %c0_i32_1 = arith.constant 0 : i32
    return %c0_i32, %c0_i32_0 : i32, i32
  }
  func.func @transform_8(%arg0: i32) -> (i32, i32) {
    %c0_i32 = arith.constant 0 : i32
    %c0_i32_0 = arith.constant 0 : i32
    %c0_i32_1 = arith.constant 0 : i32
    return %c0_i32, %c0_i32_0 : i32, i32
  }
  func.func @transform_9(%arg0: i32) -> (i32, i32) {
    %c0_i32 = arith.constant 0 : i32
    %c0_i32_0 = arith.constant 0 : i32
    return %c0_i32, %arg0 : i32, i32
  }
}

</mosaic_0001>

<llo_original>
// kernel: tpu_custom_call.1
$region0: #{tpu_custom_call.1}
  #allocation0 [shape = 'u32[]', space=smem, size = 0x4, offset = 0x4, fixed_abs, tag = 'smem constant byte address 0x4 - core index']
  #allocation1 [shape = 'u32[144,128]{1,0:T(1,128)}', space=vmem, size = 0x12000, scoped, tag = 'internal scratch']
  #allocation2 [shape = 'f32[1,1]{1,0:T(1,128)S(1)}', space=vmem, size = 0x200, scoped, tag = 'scoped memory for tpu_custom_call.1']
  %s0 = inlined_call_operand.vmem [shape: bf16[128,768], index: 0, kind: input, shape index: {}]
  %s1 = inlined_call_operand.hbm [shape: bf16[128,768], index: 1, kind: input, shape index: {}]
  %s2 = inlined_call_operand.hbm [shape: bf16[256,768], index: 2, kind: input, shape index: {}]
  %s3 = inlined_call_operand.hbm [shape: bf16[256,768], index: 3, kind: input, shape index: {}]
  %s4 = inlined_call_operand.vmem [shape: f32[256,1], index: 4, kind: input, shape index: {}]
  %s5 = inlined_call_operand.hbm [shape: bf16[64,256], index: 5, kind: input, shape index: {}]
  %s6 = inlined_call_operand.vmem [shape: f32[64,1], index: 6, kind: input, shape index: {}]
  %s7 = inlined_call_operand.vmem [shape: f32[64,1], index: 7, kind: input, shape index: {}]
  %s8 = inlined_call_operand.<no memory space> [shape: f32[1,1], index: 8, kind: input, shape index: {}]
  %s9 = inlined_call_operand.hbm [shape: f32[1,128], index: 9, kind: output, shape index: {}]
  %s10 = sld [smem:[#allocation0]]
  $region62: #{tpu_custom_call.1} parent=0
    _
  %s12 = ssub.s32 1, %s10
  %s13 = scalar_select 0, %s12, %s10
  %v14 = vstv %s8
  %15 = vst [vmem:[#allocation2] sm:$0x1] %v14
  $region1: #{tpu_custom_call.1} parent=0
    #allocation3 [shape = 'u8[196608]{0}', space=vmem, size = 0x30000, scoped, tag = 'input window, operand 1, single buffered']
    #allocation4 [shape = 's32[1]{0}', space=sflag, size = 0x4, scoped, tag = 'scoped memory for tpu_custom_call.1']
    #allocation5 [shape = 's32[1]{0}', space=sflag, size = 0x4, scoped, tag = 'scoped memory for tpu_custom_call.1']
    #allocation6 [shape = 'u8[393216]{0}', space=vmem, size = 0x60000, scoped, tag = 'input window, operand 2, single buffered']
    #allocation7 [shape = 's32[1]{0}', space=sflag, size = 0x4, scoped, tag = 'scoped memory for tpu_custom_call.1']
    #allocation8 [shape = 'u8[393216]{0}', space=vmem, size = 0x60000, scoped, tag = 'input window, operand 3, single buffered']
    #allocation9 [shape = 'u8[32768]{0}', space=vmem, size = 0x8000, scoped, tag = 'input window, operand 5, single buffered']
    #allocation10 [shape = 's32[1]{0}', space=sflag, size = 0x4, scoped, tag = 'scoped memory for tpu_custom_call.1']
    #allocation11 [shape = 'u8[512]{0}', space=vmem, size = 0x400, scoped, tag = 'output window, operand 0, single buffered']
    %16 = vsyncpa [#allocation4], 0
    %17 = vsyncpa [#allocation7], 0
    %18 = vsyncpa [#allocation10], 0
    %19 = vsyncpa [#allocation5], 0
    // Predicated region
    $region2: #{tpu_custom_call.1} parent=1 // pred_check
      _
    $region3: #{tpu_custom_call.1} parent=1 // pred_check_branch
      %21 = sbr.rel (0) target = $region5
    $region4: #{tpu_custom_call.1} parent=1 // pred_region
      _
    $region5: #{tpu_custom_call.1} parent=1 // pred_fallthru
      _
    // Predicated region
    $region6: #{tpu_custom_call.1} parent=1 // pred_check
      _
    $region7: #{tpu_custom_call.1} parent=1 // pred_check_branch
      %23 = sbr.rel (0) target = $region9
    $region8: #{tpu_custom_call.1} parent=1 // pred_region
      %s25 = ssub.s32 6144, 6144
      %26 = vsyncadd [#allocation4], %s25
      %s27 = sshll.u32 [#allocation3], 4
      %s28 = int_to_ptr.vmem [resolvable:$true] %s27
      %33 = dma.hbm_to_vmem [thread:$0]  %s1, 6144, %s28, [#allocation4], 384, 384, 24
    $region9: #{tpu_custom_call.1} parent=1 // pred_fallthru
      _
    // Predicated region
    $region10: #{tpu_custom_call.1} parent=1 // pred_check
      _
    $region11: #{tpu_custom_call.1} parent=1 // pred_check_branch
      %35 = sbr.rel (0) target = $region13
    $region12: #{tpu_custom_call.1} parent=1 // pred_region
      %s37 = ssub.s32 12288, 12288
      %38 = vsyncadd [#allocation7], %s37
      %s39 = sshll.u32 [#allocation6], 4
      %s40 = int_to_ptr.vmem [resolvable:$true] %s39
      %45 = dma.hbm_to_vmem [thread:$0]  %s2, 12288, %s40, [#allocation7], 384, 384, 24
    $region13: #{tpu_custom_call.1} parent=1 // pred_fallthru
      _
    // Predicated region
    $region14: #{tpu_custom_call.1} parent=1 // pred_check
      _
    $region15: #{tpu_custom_call.1} parent=1 // pred_check_branch
      %47 = sbr.rel (0) target = $region17
    $region16: #{tpu_custom_call.1} parent=1 // pred_region
      %s49 = ssub.s32 12288, 12288
      %50 = vsyncadd [#allocation7], %s49
      %s51 = sshll.u32 [#allocation8], 4
      %s52 = int_to_ptr.vmem [resolvable:$true] %s51
      %57 = dma.hbm_to_vmem [thread:$0]  %s3, 12288, %s52, [#allocation7], 384, 384, 24
    $region17: #{tpu_custom_call.1} parent=1 // pred_fallthru
      _
    // Predicated region
    $region18: #{tpu_custom_call.1} parent=1 // pred_check
      _
    $region19: #{tpu_custom_call.1} parent=1 // pred_check_branch
      %59 = sbr.rel (0) target = $region21
    $region20: #{tpu_custom_call.1} parent=1 // pred_region
      _
    $region21: #{tpu_custom_call.1} parent=1 // pred_fallthru
      _
    // Predicated region
    $region22: #{tpu_custom_call.1} parent=1 // pred_check
      _
    $region23: #{tpu_custom_call.1} parent=1 // pred_check_branch
      %61 = sbr.rel (0) target = $region25
    $region24: #{tpu_custom_call.1} parent=1 // pred_region
      %s63 = ssub.s32 1024, 1024
      %64 = vsyncadd [#allocation10], %s63
      %s65 = sshll.u32 [#allocation9], 4
      %s66 = int_to_ptr.vmem [resolvable:$true] %s65
      %71 = dma.hbm_to_vmem [thread:$0]  %s5, 1024, %s66, [#allocation10], 128, 128, 8
    $region25: #{tpu_custom_call.1} parent=1 // pred_fallthru
      _
    // Predicated region
    $region26: #{tpu_custom_call.1} parent=1 // pred_check
      _
    $region27: #{tpu_custom_call.1} parent=1 // pred_check_branch
      %73 = sbr.rel (0) target = $region29
    $region28: #{tpu_custom_call.1} parent=1 // pred_region
      _
    $region29: #{tpu_custom_call.1} parent=1 // pred_fallthru
      _
    // Predicated region
    $region30: #{tpu_custom_call.1} parent=1 // pred_check
      _
    $region31: #{tpu_custom_call.1} parent=1 // pred_check_branch
      %75 = sbr.rel (0) target = $region33
    $region32: #{tpu_custom_call.1} parent=1 // pred_region
      _
    $region33: #{tpu_custom_call.1} parent=1 // pred_fallthru
      _
    // Predicated region
    $region34: #{tpu_custom_call.1} parent=1 // pred_check
      _
    $region35: #{tpu_custom_call.1} parent=1 // pred_check_branch
      %77 = sbr.rel (0) target = $region37
    $region36: #{tpu_custom_call.1} parent=1 // pred_region
      _
    $region37: #{tpu_custom_call.1} parent=1 // pred_fallthru
      _
    // Predicated region
    $region38: #{tpu_custom_call.1} parent=1 // pred_check
      _
    $region39: #{tpu_custom_call.1} parent=1 // pred_check_branch
      %79 = sbr.rel (0) target = $region41
    $region40: #{tpu_custom_call.1} parent=1 // pred_region
      %80 = dma.done [#allocation4], 6144
    $region41: #{tpu_custom_call.1} parent=1 // pred_fallthru
      _
    // Predicated region
    $region42: #{tpu_custom_call.1} parent=1 // pred_check
      _
    $region43: #{tpu_custom_call.1} parent=1 // pred_check_branch
      %82 = sbr.rel (0) target = $region45
    $region44: #{tpu_custom_call.1} parent=1 // pred_region
      %83 = dma.done [#allocation7], 12288
    $region45: #{tpu_custom_call.1} parent=1 // pred_fallthru
      _
    // Predicated region
    $region46: #{tpu_custom_call.1} parent=1 // pred_check
      _
    $region47: #{tpu_custom_call.1} parent=1 // pred_check_branch
      %85 = sbr.rel (0) target = $region49
    $region48: #{tpu_custom_call.1} parent=1 // pred_region
      %86 = dma.done [#allocation7], 12288
    $region49: #{tpu_custom_call.1} parent=1 // pred_fallthru
      _
    // Predicated region
    $region50: #{tpu_custom_call.1} parent=1 // pred_check
      _
    $region51: #{tpu_custom_call.1} parent=1 // pred_check_branch
      %88 = sbr.rel (0) target = $region53
    $region52: #{tpu_custom_call.1} parent=1 // pred_region
      %89 = dma.done [#allocation10], 1024
    $region53: #{tpu_custom_call.1} parent=1 // pred_fallthru
      _
    %v91 = vld [vmem:[#allocation6] sm:$0xff]
    %v92 = vld [vmem:[#allocation6 + $0x8] sm:$0xff]
    %v93 = vld [vmem:[#allocation6 + $0x10] sm:$0xff]
    %v94 = vld [vmem:[#allocation6 + $0x18] sm:$0xff]
    %v95 = vld [vmem:[#allocation6 + $0x20] sm:$0xff]
    %v96 = vld [vmem:[#allocation6 + $0x28] sm:$0xff]
    %v97 = vld [vmem:[#allocation6 + $0x30] sm:$0xff]
    %v98 = vld [vmem:[#allocation6 + $0x38] sm:$0xff]
    %v99 = vld [vmem:[#allocation6 + $0x40] sm:$0xff]
    %v100 = vld [vmem:[#allocation6 + $0x48] sm:$0xff]
    %v101 = vld [vmem:[#allocation6 + $0x50] sm:$0xff]
    %v102 = vld [vmem:[#allocation6 + $0x58] sm:$0xff]
    %v103 = vld [vmem:[#allocation6 + $0x60] sm:$0xff]
    %v104 = vld [vmem:[#allocation6 + $0x68] sm:$0xff]
    %v105 = vld [vmem:[#allocation6 + $0x70] sm:$0xff]
    %v106 = vld [vmem:[#allocation6 + $0x78] sm:$0xff]
    %v107 = vld [vmem:[#allocation6 + $0x80] sm:$0xff]
    %v108 = vld [vmem:[#allocation6 + $0x88] sm:$0xff]
    %v109 = vld [vmem:[#allocation6 + $0x90] sm:$0xff]
    %v110 = vld [vmem:[#allocation6 + $0x98] sm:$0xff]
    %v111 = vld [vmem:[#allocation6 + $0xa0] sm:$0xff]
    %v112 = vld [vmem:[#allocation6 + $0xa8] sm:$0xff]
    %v113 = vld [vmem:[#allocation6 + $0xb0] sm:$0xff]
    %v114 = vld [vmem:[#allocation6 + $0xb8] sm:$0xff]
    %v115 = vld [vmem:[#allocation6 + $0xc0] sm:$0xff]
    %v116 = vld [vmem:[#allocation6 + $0xc8] sm:$0xff]
    %v117 = vld [vmem:[#allocation6 + $0xd0] sm:$0xff]
    %v118 = vld [vmem:[#allocation6 + $0xd8] sm:$0xff]
    %v119 = vld [vmem:[#allocation6 + $0xe0] sm:$0xff]
    %v120 = vld [vmem:[#allocation6 + $0xe8] sm:$0xff]
    %v121 = vld [vmem:[#allocation6 + $0xf0] sm:$0xff]
    %v122 = vld [vmem:[#allocation6 + $0xf8] sm:$0xff]
    %v123 = vld [vmem:[#allocation6 + $0x100] sm:$0xff]
    %v124 = vld [vmem:[#allocation6 + $0x108] sm:$0xff]
    %v125 = vld [vmem:[#allocation6 + $0x110] sm:$0xff]
    %v126 = vld [vmem:[#allocation6 + $0x118] sm:$0xff]
    %v127 = vld [vmem:[#allocation6 + $0x120] sm:$0xff]
    %v128 = vld [vmem:[#allocation6 + $0x128] sm:$0xff]
    %v129 = vld [vmem:[#allocation6 + $0x130] sm:$0xff]
    %v130 = vld [vmem:[#allocation6 + $0x138] sm:$0xff]
    %v131 = vld [vmem:[#allocation6 + $0x140] sm:$0xff]
    %v132 = vld [vmem:[#allocation6 + $0x148] sm:$0xff]
    %v133 = vld [vmem:[#allocation6 + $0x150] sm:$0xff]
    %v134 = vld [vmem:[#allocation6 + $0x158] sm:$0xff]
    %v135 = vld [vmem:[#allocation6 + $0x160] sm:$0xff]
    %v136 = vld [vmem:[#allocation6 + $0x168] sm:$0xff]
    %v137 = vld [vmem:[#allocation6 + $0x170] sm:$0xff]
    %v138 = vld [vmem:[#allocation6 + $0x178] sm:$0xff]
    %v139 = vld [vmem:[#allocation6 + $0x180] sm:$0xff]
    %v140 = vld [vmem:[#allocation6 + $0x188] sm:$0xff]
    %v141 = vld [vmem:[#allocation6 + $0x190] sm:$0xff]
    %v142 = vld [vmem:[#allocation6 + $0x198] sm:$0xff]
    %v143 = vld [vmem:[#allocation6 + $0x1a0] sm:$0xff]
    %v144 = vld [vmem:[#allocation6 + $0x1a8] sm:$0xff]
    %v145 = vld [vmem:[#allocation6 + $0x1b0] sm:$0xff]
    %v146 = vld [vmem:[#allocation6 + $0x1b8] sm:$0xff]
    %v147 = vld [vmem:[#allocation6 + $0x1c0] sm:$0xff]
    %v148 = vld [vmem:[#allocation6 + $0x1c8] sm:$0xff]
    %v149 = vld [vmem:[#allocation6 + $0x1d0] sm:$0xff]
    %v150 = vld [vmem:[#allocation6 + $0x1d8] sm:$0xff]
    %v151 = vld [vmem:[#allocation6 + $0x1e0] sm:$0xff]
    %v152 = vld [vmem:[#allocation6 + $0x1e8] sm:$0xff]
    %v153 = vld [vmem:[#allocation6 + $0x1f0] sm:$0xff]
    %v154 = vld [vmem:[#allocation6 + $0x1f8] sm:$0xff]
    %v155 = vld [vmem:[#allocation6 + $0x200] sm:$0xff]
    %v156 = vld [vmem:[#allocation6 + $0x208] sm:$0xff]
    %v157 = vld [vmem:[#allocation6 + $0x210] sm:$0xff]
    %v158 = vld [vmem:[#allocation6 + $0x218] sm:$0xff]
    %v159 = vld [vmem:[#allocation6 + $0x220] sm:$0xff]
    %v160 = vld [vmem:[#allocation6 + $0x228] sm:$0xff]
    %v161 = vld [vmem:[#allocation6 + $0x230] sm:$0xff]
    %v162 = vld [vmem:[#allocation6 + $0x238] sm:$0xff]
    %v163 = vld [vmem:[#allocation6 + $0x240] sm:$0xff]
    %v164 = vld [vmem:[#allocation6 + $0x248] sm:$0xff]
    %v165 = vld [vmem:[#allocation6 + $0x250] sm:$0xff]
    %v166 = vld [vmem:[#allocation6 + $0x258] sm:$0xff]
    %v167 = vld [vmem:[#allocation6 + $0x260] sm:$0xff]
    %v168 = vld [vmem:[#allocation6 + $0x268] sm:$0xff]
    %v169 = vld [vmem:[#allocation6 + $0x270] sm:$0xff]
    %v170 = vld [vmem:[#allocation6 + $0x278] sm:$0xff]
    %v171 = vld [vmem:[#allocation6 + $0x280] sm:$0xff]
    %v172 = vld [vmem:[#allocation6 + $0x288] sm:$0xff]
    %v173 = vld [vmem:[#allocation6 + $0x290] sm:$0xff]
    %v174 = vld [vmem:[#allocation6 + $0x298] sm:$0xff]
    %v175 = vld [vmem:[#allocation6 + $0x2a0] sm:$0xff]
    %v176 = vld [vmem:[#allocation6 + $0x2a8] sm:$0xff]
    %v177 = vld [vmem:[#allocation6 + $0x2b0] sm:$0xff]
    %v178 = vld [vmem:[#allocation6 + $0x2b8] sm:$0xff]
    %v179 = vld [vmem:[#allocation6 + $0x2c0] sm:$0xff]
    %v180 = vld [vmem:[#allocation6 + $0x2c8] sm:$0xff]
    %v181 = vld [vmem:[#allocation6 + $0x2d0] sm:$0xff]
    %v182 = vld [vmem:[#allocation6 + $0x2d8] sm:$0xff]
    %v183 = vld [vmem:[#allocation6 + $0x2e0] sm:$0xff]
    %v184 = vld [vmem:[#allocation6 + $0x2e8] sm:$0xff]
    %v185 = vld [vmem:[#allocation6 + $0x2f0] sm:$0xff]
    %v186 = vld [vmem:[#allocation6 + $0x2f8] sm:$0xff]
    %v187 = vld [vmem:[%s0] sm:$0xff]
    %v188 = vld [vmem:[%s0 + $0x8] sm:$0xff]
    %v189 = vld [vmem:[%s0 + $0x10] sm:$0xff]
    %v190 = vld [vmem:[%s0 + $0x18] sm:$0xff]
    %v191 = vld [vmem:[%s0 + $0x20] sm:$0xff]
    %v192 = vld [vmem:[%s0 + $0x28] sm:$0xff]
    %v193 = vld [vmem:[%s0 + $0x30] sm:$0xff]
    %v194 = vld [vmem:[%s0 + $0x38] sm:$0xff]
    %v195 = vld [vmem:[%s0 + $0x40] sm:$0xff]
    %v196 = vld [vmem:[%s0 + $0x48] sm:$0xff]
    %v197 = vld [vmem:[%s0 + $0x50] sm:$0xff]
    %v198 = vld [vmem:[%s0 + $0x58] sm:$0xff]
    %v199 = vld [vmem:[%s0 + $0x60] sm:$0xff]
    %v200 = vld [vmem:[%s0 + $0x68] sm:$0xff]
    %v201 = vld [vmem:[%s0 + $0x70] sm:$0xff]
    %v202 = vld [vmem:[%s0 + $0x78] sm:$0xff]
    %v203 = vld [vmem:[%s0 + $0x80] sm:$0xff]
    %v204 = vld [vmem:[%s0 + $0x88] sm:$0xff]
    %v205 = vld [vmem:[%s0 + $0x90] sm:$0xff]
    %v206 = vld [vmem:[%s0 + $0x98] sm:$0xff]
    %v207 = vld [vmem:[%s0 + $0xa0] sm:$0xff]
    %v208 = vld [vmem:[%s0 + $0xa8] sm:$0xff]
    %v209 = vld [vmem:[%s0 + $0xb0] sm:$0xff]
    %v210 = vld [vmem:[%s0 + $0xb8] sm:$0xff]
    %v211 = vld [vmem:[%s0 + $0xc0] sm:$0xff]
    %v212 = vld [vmem:[%s0 + $0xc8] sm:$0xff]
    %v213 = vld [vmem:[%s0 + $0xd0] sm:$0xff]
    %v214 = vld [vmem:[%s0 + $0xd8] sm:$0xff]
    %v215 = vld [vmem:[%s0 + $0xe0] sm:$0xff]
    %v216 = vld [vmem:[%s0 + $0xe8] sm:$0xff]
    %v217 = vld [vmem:[%s0 + $0xf0] sm:$0xff]
    %v218 = vld [vmem:[%s0 + $0xf8] sm:$0xff]
    %v219 = vld [vmem:[%s0 + $0x100] sm:$0xff]
    %v220 = vld [vmem:[%s0 + $0x108] sm:$0xff]
    %v221 = vld [vmem:[%s0 + $0x110] sm:$0xff]
    %v222 = vld [vmem:[%s0 + $0x118] sm:$0xff]
    %v223 = vld [vmem:[%s0 + $0x120] sm:$0xff]
    %v224 = vld [vmem:[%s0 + $0x128] sm:$0xff]
    %v225 = vld [vmem:[%s0 + $0x130] sm:$0xff]
    %v226 = vld [vmem:[%s0 + $0x138] sm:$0xff]
    %v227 = vld [vmem:[%s0 + $0x140] sm:$0xff]
    %v228 = vld [vmem:[%s0 + $0x148] sm:$0xff]
    %v229 = vld [vmem:[%s0 + $0x150] sm:$0xff]
    %v230 = vld [vmem:[%s0 + $0x158] sm:$0xff]
    %v231 = vld [vmem:[%s0 + $0x160] sm:$0xff]
    %v232 = vld [vmem:[%s0 + $0x168] sm:$0xff]
    %v233 = vld [vmem:[%s0 + $0x170] sm:$0xff]
    %v234 = vld [vmem:[%s0 + $0x178] sm:$0xff]
    %v235 = vld [vmem:[#allocation8] sm:$0xff]
    %v236 = vld [vmem:[#allocation8 + $0x8] sm:$0xff]
    %v237 = vld [vmem:[#allocation8 + $0x10] sm:$0xff]
    %v238 = vld [vmem:[#allocation8 + $0x18] sm:$0xff]
    %v239 = vld [vmem:[#allocation8 + $0x20] sm:$0xff]
    %v240 = vld [vmem:[#allocation8 + $0x28] sm:$0xff]
    %v241 = vld [vmem:[#allocation8 + $0x30] sm:$0xff]
    %v242 = vld [vmem:[#allocation8 + $0x38] sm:$0xff]
    %v243 = vld [vmem:[#allocation8 + $0x40] sm:$0xff]
    %v244 = vld [vmem:[#allocation8 + $0x48] sm:$0xff]
    %v245 = vld [vmem:[#allocation8 + $0x50] sm:$0xff]
    %v246 = vld [vmem:[#allocation8 + $0x58] sm:$0xff]
    %v247 = vld [vmem:[#allocation8 + $0x60] sm:$0xff]
    %v248 = vld [vmem:[#allocation8 + $0x68] sm:$0xff]
    %v249 = vld [vmem:[#allocation8 + $0x70] sm:$0xff]
    %v250 = vld [vmem:[#allocation8 + $0x78] sm:$0xff]
    %v251 = vld [vmem:[#allocation8 + $0x80] sm:$0xff]
    %v252 = vld [vmem:[#allocation8 + $0x88] sm:$0xff]
    %v253 = vld [vmem:[#allocation8 + $0x90] sm:$0xff]
    %v254 = vld [vmem:[#allocation8 + $0x98] sm:$0xff]
    %v255 = vld [vmem:[#allocation8 + $0xa0] sm:$0xff]
    %v256 = vld [vmem:[#allocation8 + $0xa8] sm:$0xff]
    %v257 = vld [vmem:[#allocation8 + $0xb0] sm:$0xff]
    %v258 = vld [vmem:[#allocation8 + $0xb8] sm:$0xff]
    %v259 = vld [vmem:[#allocation8 + $0xc0] sm:$0xff]
    %v260 = vld [vmem:[#allocation8 + $0xc8] sm:$0xff]
    %v261 = vld [vmem:[#allocation8 + $0xd0] sm:$0xff]
    %v262 = vld [vmem:[#allocation8 + $0xd8] sm:$0xff]
    %v263 = vld [vmem:[#allocation8 + $0xe0] sm:$0xff]
    %v264 = vld [vmem:[#allocation8 + $0xe8] sm:$0xff]
    %v265 = vld [vmem:[#allocation8 + $0xf0] sm:$0xff]
    %v266 = vld [vmem:[#allocation8 + $0xf8] sm:$0xff]
    %v267 = vld [vmem:[#allocation8 + $0x100] sm:$0xff]
    %v268 = vld [vmem:[#allocation8 + $0x108] sm:$0xff]
    %v269 = vld [vmem:[#allocation8 + $0x110] sm:$0xff]
    %v270 = vld [vmem:[#allocation8 + $0x118] sm:$0xff]
    %v271 = vld [vmem:[#allocation8 + $0x120] sm:$0xff]
    %v272 = vld [vmem:[#allocation8 + $0x128] sm:$0xff]
    %v273 = vld [vmem:[#allocation8 + $0x130] sm:$0xff]
    %v274 = vld [vmem:[#allocation8 + $0x138] sm:$0xff]
    %v275 = vld [vmem:[#allocation8 + $0x140] sm:$0xff]
    %v276 = vld [vmem:[#allocation8 + $0x148] sm:$0xff]
    %v277 = vld [vmem:[#allocation8 + $0x150] sm:$0xff]
    %v278 = vld [vmem:[#allocation8 + $0x158] sm:$0xff]
    %v279 = vld [vmem:[#allocation8 + $0x160] sm:$0xff]
    %v280 = vld [vmem:[#allocation8 + $0x168] sm:$0xff]
    %v281 = vld [vmem:[#allocation8 + $0x170] sm:$0xff]
    %v282 = vld [vmem:[#allocation8 + $0x178] sm:$0xff]
    %v283 = vld [vmem:[#allocation8 + $0x180] sm:$0xff]
    %v284 = vld [vmem:[#allocation8 + $0x188] sm:$0xff]
    %v285 = vld [vmem:[#allocation8 + $0x190] sm:$0xff]
    %v286 = vld [vmem:[#allocation8 + $0x198] sm:$0xff]
    %v287 = vld [vmem:[#allocation8 + $0x1a0] sm:$0xff]
    %v288 = vld [vmem:[#allocation8 + $0x1a8] sm:$0xff]
    %v289 = vld [vmem:[#allocation8 + $0x1b0] sm:$0xff]
    %v290 = vld [vmem:[#allocation8 + $0x1b8] sm:$0xff]
    %v291 = vld [vmem:[#allocation8 + $0x1c0] sm:$0xff]
    %v292 = vld [vmem:[#allocation8 + $0x1c8] sm:$0xff]
    %v293 = vld [vmem:[#allocation8 + $0x1d0] sm:$0xff]
    %v294 = vld [vmem:[#allocation8 + $0x1d8] sm:$0xff]
    %v295 = vld [vmem:[#allocation8 + $0x1e0] sm:$0xff]
    %v296 = vld [vmem:[#allocation8 + $0x1e8] sm:$0xff]
    %v297 = vld [vmem:[#allocation8 + $0x1f0] sm:$0xff]
    %v298 = vld [vmem:[#allocation8 + $0x1f8] sm:$0xff]
    %v299 = vld [vmem:[#allocation8 + $0x200] sm:$0xff]
    %v300 = vld [vmem:[#allocation8 + $0x208] sm:$0xff]
    %v301 = vld [vmem:[#allocation8 + $0x210] sm:$0xff]
    %v302 = vld [vmem:[#allocation8 + $0x218] sm:$0xff]
    %v303 = vld [vmem:[#allocation8 + $0x220] sm:$0xff]
    %v304 = vld [vmem:[#allocation8 + $0x228] sm:$0xff]
    %v305 = vld [vmem:[#allocation8 + $0x230] sm:$0xff]
    %v306 = vld [vmem:[#allocation8 + $0x238] sm:$0xff]
    %v307 = vld [vmem:[#allocation8 + $0x240] sm:$0xff]
    %v308 = vld [vmem:[#allocation8 + $0x248] sm:$0xff]
    %v309 = vld [vmem:[#allocation8 + $0x250] sm:$0xff]
    %v310 = vld [vmem:[#allocation8 + $0x258] sm:$0xff]
    %v311 = vld [vmem:[#allocation8 + $0x260] sm:$0xff]
    %v312 = vld [vmem:[#allocation8 + $0x268] sm:$0xff]
    %v313 = vld [vmem:[#allocation8 + $0x270] sm:$0xff]
    %v314 = vld [vmem:[#allocation8 + $0x278] sm:$0xff]
    %v315 = vld [vmem:[#allocation8 + $0x280] sm:$0xff]
    %v316 = vld [vmem:[#allocation8 + $0x288] sm:$0xff]
    %v317 = vld [vmem:[#allocation8 + $0x290] sm:$0xff]
    %v318 = vld [vmem:[#allocation8 + $0x298] sm:$0xff]
    %v319 = vld [vmem:[#allocation8 + $0x2a0] sm:$0xff]
    %v320 = vld [vmem:[#allocation8 + $0x2a8] sm:$0xff]
    %v321 = vld [vmem:[#allocation8 + $0x2b0] sm:$0xff]
    %v322 = vld [vmem:[#allocation8 + $0x2b8] sm:$0xff]
    %v323 = vld [vmem:[#allocation8 + $0x2c0] sm:$0xff]
    %v324 = vld [vmem:[#allocation8 + $0x2c8] sm:$0xff]
    %v325 = vld [vmem:[#allocation8 + $0x2d0] sm:$0xff]
    %v326 = vld [vmem:[#allocation8 + $0x2d8] sm:$0xff]
    %v327 = vld [vmem:[#allocation8 + $0x2e0] sm:$0xff]
    %v328 = vld [vmem:[#allocation8 + $0x2e8] sm:$0xff]
    %v329 = vld [vmem:[#allocation8 + $0x2f0] sm:$0xff]
    %v330 = vld [vmem:[#allocation8 + $0x2f8] sm:$0xff]
    %v331 = vld [vmem:[#allocation3] sm:$0xff]
    %v332 = vld [vmem:[#allocation3 + $0x8] sm:$0xff]
    %v333 = vld [vmem:[#allocation3 + $0x10] sm:$0xff]
    %v334 = vld [vmem:[#allocation3 + $0x18] sm:$0xff]
    %v335 = vld [vmem:[#allocation3 + $0x20] sm:$0xff]
    %v336 = vld [vmem:[#allocation3 + $0x28] sm:$0xff]
    %v337 = vld [vmem:[#allocation3 + $0x30] sm:$0xff]
    %v338 = vld [vmem:[#allocation3 + $0x38] sm:$0xff]
    %v339 = vld [vmem:[#allocation3 + $0x40] sm:$0xff]
    %v340 = vld [vmem:[#allocation3 + $0x48] sm:$0xff]
    %v341 = vld [vmem:[#allocation3 + $0x50] sm:$0xff]
    %v342 = vld [vmem:[#allocation3 + $0x58] sm:$0xff]
    %v343 = vld [vmem:[#allocation3 + $0x60] sm:$0xff]
    %v344 = vld [vmem:[#allocation3 + $0x68] sm:$0xff]
    %v345 = vld [vmem:[#allocation3 + $0x70] sm:$0xff]
    %v346 = vld [vmem:[#allocation3 + $0x78] sm:$0xff]
    %v347 = vld [vmem:[#allocation3 + $0x80] sm:$0xff]
    %v348 = vld [vmem:[#allocation3 + $0x88] sm:$0xff]
    %v349 = vld [vmem:[#allocation3 + $0x90] sm:$0xff]
    %v350 = vld [vmem:[#allocation3 + $0x98] sm:$0xff]
    %v351 = vld [vmem:[#allocation3 + $0xa0] sm:$0xff]
    %v352 = vld [vmem:[#allocation3 + $0xa8] sm:$0xff]
    %v353 = vld [vmem:[#allocation3 + $0xb0] sm:$0xff]
    %v354 = vld [vmem:[#allocation3 + $0xb8] sm:$0xff]
    %v355 = vld [vmem:[#allocation3 + $0xc0] sm:$0xff]
    %v356 = vld [vmem:[#allocation3 + $0xc8] sm:$0xff]
    %v357 = vld [vmem:[#allocation3 + $0xd0] sm:$0xff]
    %v358 = vld [vmem:[#allocation3 + $0xd8] sm:$0xff]
    %v359 = vld [vmem:[#allocation3 + $0xe0] sm:$0xff]
    %v360 = vld [vmem:[#allocation3 + $0xe8] sm:$0xff]
    %v361 = vld [vmem:[#allocation3 + $0xf0] sm:$0xff]
    %v362 = vld [vmem:[#allocation3 + $0xf8] sm:$0xff]
    %v363 = vld [vmem:[#allocation3 + $0x100] sm:$0xff]
    %v364 = vld [vmem:[#allocation3 + $0x108] sm:$0xff]
    %v365 = vld [vmem:[#allocation3 + $0x110] sm:$0xff]
    %v366 = vld [vmem:[#allocation3 + $0x118] sm:$0xff]
    %v367 = vld [vmem:[#allocation3 + $0x120] sm:$0xff]
    %v368 = vld [vmem:[#allocation3 + $0x128] sm:$0xff]
    %v369 = vld [vmem:[#allocation3 + $0x130] sm:$0xff]
    %v370 = vld [vmem:[#allocation3 + $0x138] sm:$0xff]
    %v371 = vld [vmem:[#allocation3 + $0x140] sm:$0xff]
    %v372 = vld [vmem:[#allocation3 + $0x148] sm:$0xff]
    %v373 = vld [vmem:[#allocation3 + $0x150] sm:$0xff]
    %v374 = vld [vmem:[#allocation3 + $0x158] sm:$0xff]
    %v375 = vld [vmem:[#allocation3 + $0x160] sm:$0xff]
    %v376 = vld [vmem:[#allocation3 + $0x168] sm:$0xff]
    %v377 = vld [vmem:[#allocation3 + $0x170] sm:$0xff]
    %v378 = vld [vmem:[#allocation3 + $0x178] sm:$0xff]
    %v475 = vunpack.c.l.b16 %v235
    %v476 = vunpack.c.h.b16 %v235
    %v477 = vunpack.c.l.b16 %v236
    %v478 = vunpack.c.h.b16 %v236
    %v479 = vunpack.c.l.b16 %v237
    %v480 = vunpack.c.h.b16 %v237
    %v481 = vunpack.c.l.b16 %v238
    %v482 = vunpack.c.h.b16 %v238
    %v483 = vunpack.c.l.b16 %v239
    %v484 = vunpack.c.h.b16 %v239
    %v485 = vunpack.c.l.b16 %v240
    %v486 = vunpack.c.h.b16 %v240
    %v487 = vunpack.c.l.b16 %v241
    %v488 = vunpack.c.h.b16 %v241
    %v489 = vunpack.c.l.b16 %v242
    %v490 = vunpack.c.h.b16 %v242
    %v491 = vunpack.c.l.b16 %v243
    %v492 = vunpack.c.h.b16 %v243
    %v493 = vunpack.c.l.b16 %v244
    %v494 = vunpack.c.h.b16 %v244
    %v495 = vunpack.c.l.b16 %v245
    %v496 = vunpack.c.h.b16 %v245
    %v497 = vunpack.c.l.b16 %v246
    %v498 = vunpack.c.h.b16 %v246
    %v499 = vunpack.c.l.b16 %v247
    %v500 = vunpack.c.h.b16 %v247
    %v501 = vunpack.c.l.b16 %v248
    %v502 = vunpack.c.h.b16 %v248
    %v503 = vunpack.c.l.b16 %v249
    %v504 = vunpack.c.h.b16 %v249
    %v505 = vunpack.c.l.b16 %v250
    %v506 = vunpack.c.h.b16 %v250
    %v507 = vunpack.c.l.b16 %v251
    %v508 = vunpack.c.h.b16 %v251
    %v509 = vunpack.c.l.b16 %v252
    %v510 = vunpack.c.h.b16 %v252
    %v511 = vunpack.c.l.b16 %v253
    %v512 = vunpack.c.h.b16 %v253
    %v513 = vunpack.c.l.b16 %v254
    %v514 = vunpack.c.h.b16 %v254
    %v515 = vunpack.c.l.b16 %v255
    %v516 = vunpack.c.h.b16 %v255
    %v517 = vunpack.c.l.b16 %v256
    %v518 = vunpack.c.h.b16 %v256
    %v519 = vunpack.c.l.b16 %v257
    %v520 = vunpack.c.h.b16 %v257
    %v521 = vunpack.c.l.b16 %v258
    %v522 = vunpack.c.h.b16 %v258
    %v523 = vunpack.c.l.b16 %v259
    %v524 = vunpack.c.h.b16 %v259
    %v525 = vunpack.c.l.b16 %v260
    %v526 = vunpack.c.h.b16 %v260
    %v527 = vunpack.c.l.b16 %v261
    %v528 = vunpack.c.h.b16 %v261
    %v529 = vunpack.c.l.b16 %v262
    %v530 = vunpack.c.h.b16 %v262
    %v531 = vunpack.c.l.b16 %v263
    %v532 = vunpack.c.h.b16 %v263
    %v533 = vunpack.c.l.b16 %v264
    %v534 = vunpack.c.h.b16 %v264
    %v535 = vunpack.c.l.b16 %v265
    %v536 = vunpack.c.h.b16 %v265
    %v537 = vunpack.c.l.b16 %v266
    %v538 = vunpack.c.h.b16 %v266
    %v539 = vunpack.c.l.b16 %v267
    %v540 = vunpack.c.h.b16 %v267
    %v541 = vunpack.c.l.b16 %v268
    %v542 = vunpack.c.h.b16 %v268
    %v543 = vunpack.c.l.b16 %v269
    %v544 = vunpack.c.h.b16 %v269
    %v545 = vunpack.c.l.b16 %v270
    %v546 = vunpack.c.h.b16 %v270
    %v547 = vunpack.c.l.b16 %v271
    %v548 = vunpack.c.h.b16 %v271
    %v549 = vunpack.c.l.b16 %v272
    %v550 = vunpack.c.h.b16 %v272
    %v551 = vunpack.c.l.b16 %v273
    %v552 = vunpack.c.h.b16 %v273
    %v553 = vunpack.c.l.b16 %v274
    %v554 = vunpack.c.h.b16 %v274
    %v555 = vunpack.c.l.b16 %v275
    %v556 = vunpack.c.h.b16 %v275
    %v557 = vunpack.c.l.b16 %v276
    %v558 = vunpack.c.h.b16 %v276
    %v559 = vunpack.c.l.b16 %v277
    %v560 = vunpack.c.h.b16 %v277
    %v561 = vunpack.c.l.b16 %v278
    %v562 = vunpack.c.h.b16 %v278
    %v563 = vunpack.c.l.b16 %v279
    %v564 = vunpack.c.h.b16 %v279
    %v565 = vunpack.c.l.b16 %v280
    %v566 = vunpack.c.h.b16 %v280
    %v567 = vunpack.c.l.b16 %v281
    %v568 = vunpack.c.h.b16 %v281
    %v569 = vunpack.c.l.b16 %v282
    %v570 = vunpack.c.h.b16 %v282
    %v571 = vunpack.c.l.b16 %v283
    %v572 = vunpack.c.h.b16 %v283
    %v573 = vunpack.c.l.b16 %v284
    %v574 = vunpack.c.h.b16 %v284
    %v575 = vunpack.c.l.b16 %v285
    %v576 = vunpack.c.h.b16 %v285
    %v577 = vunpack.c.l.b16 %v286
    %v578 = vunpack.c.h.b16 %v286
    %v579 = vunpack.c.l.b16 %v287
    %v580 = vunpack.c.h.b16 %v287
    %v581 = vunpack.c.l.b16 %v288
    %v582 = vunpack.c.h.b16 %v288
    %v583 = vunpack.c.l.b16 %v289
    %v584 = vunpack.c.h.b16 %v289
    %v585 = vunpack.c.l.b16 %v290
    %v586 = vunpack.c.h.b16 %v290
    %v587 = vunpack.c.l.b16 %v291
    %v588 = vunpack.c.h.b16 %v291
    %v589 = vunpack.c.l.b16 %v292
    %v590 = vunpack.c.h.b16 %v292
    %v591 = vunpack.c.l.b16 %v293
    %v592 = vunpack.c.h.b16 %v293
    %v593 = vunpack.c.l.b16 %v294
    %v594 = vunpack.c.h.b16 %v294
    %v595 = vunpack.c.l.b16 %v295
    %v596 = vunpack.c.h.b16 %v295
    %v597 = vunpack.c.l.b16 %v296
    %v598 = vunpack.c.h.b16 %v296
    %v599 = vunpack.c.l.b16 %v297
    %v600 = vunpack.c.h.b16 %v297
    %v601 = vunpack.c.l.b16 %v298
    %v602 = vunpack.c.h.b16 %v298
    %v603 = vunpack.c.l.b16 %v299
    %v604 = vunpack.c.h.b16 %v299
    %v605 = vunpack.c.l.b16 %v300
    %v606 = vunpack.c.h.b16 %v300
    %v607 = vunpack.c.l.b16 %v301
    %v608 = vunpack.c.h.b16 %v301
    %v609 = vunpack.c.l.b16 %v302
    %v610 = vunpack.c.h.b16 %v302
    %v611 = vunpack.c.l.b16 %v303
    %v612 = vunpack.c.h.b16 %v303
    %v613 = vunpack.c.l.b16 %v304
    %v614 = vunpack.c.h.b16 %v304
    %v615 = vunpack.c.l.b16 %v305
    %v616 = vunpack.c.h.b16 %v305
    %v617 = vunpack.c.l.b16 %v306
    %v618 = vunpack.c.h.b16 %v306
    %v619 = vunpack.c.l.b16 %v307
    %v620 = vunpack.c.h.b16 %v307
    %v621 = vunpack.c.l.b16 %v308
    %v622 = vunpack.c.h.b16 %v308
    %v623 = vunpack.c.l.b16 %v309
    %v624 = vunpack.c.h.b16 %v309
    %v625 = vunpack.c.l.b16 %v310
    %v626 = vunpack.c.h.b16 %v310
    %v627 = vunpack.c.l.b16 %v311
    %v628 = vunpack.c.h.b16 %v311
    %v629 = vunpack.c.l.b16 %v312
    %v630 = vunpack.c.h.b16 %v312
    %v631 = vunpack.c.l.b16 %v313
    %v632 = vunpack.c.h.b16 %v313
    %v633 = vunpack.c.l.b16 %v314
    %v634 = vunpack.c.h.b16 %v314
    %v635 = vunpack.c.l.b16 %v315
    %v636 = vunpack.c.h.b16 %v315
    %v637 = vunpack.c.l.b16 %v316
    %v638 = vunpack.c.h.b16 %v316
    %v639 = vunpack.c.l.b16 %v317
    %v640 = vunpack.c.h.b16 %v317
    %v641 = vunpack.c.l.b16 %v318
    %v642 = vunpack.c.h.b16 %v318
    %v643 = vunpack.c.l.b16 %v319
    %v644 = vunpack.c.h.b16 %v319
    %v645 = vunpack.c.l.b16 %v320
    %v646 = vunpack.c.h.b16 %v320
    %v647 = vunpack.c.l.b16 %v321
    %v648 = vunpack.c.h.b16 %v321
    %v649 = vunpack.c.l.b16 %v322
    %v650 = vunpack.c.h.b16 %v322
    %v651 = vunpack.c.l.b16 %v323
    %v652 = vunpack.c.h.b16 %v323
    %v653 = vunpack.c.l.b16 %v324
    %v654 = vunpack.c.h.b16 %v324
    %v655 = vunpack.c.l.b16 %v325
    %v656 = vunpack.c.h.b16 %v325
    %v657 = vunpack.c.l.b16 %v326
    %v658 = vunpack.c.h.b16 %v326
    %v659 = vunpack.c.l.b16 %v327
    %v660 = vunpack.c.h.b16 %v327
    %v661 = vunpack.c.l.b16 %v328
    %v662 = vunpack.c.h.b16 %v328
    %v663 = vunpack.c.l.b16 %v329
    %v664 = vunpack.c.h.b16 %v329
    %v665 = vunpack.c.l.b16 %v330
    %v666 = vunpack.c.h.b16 %v330
    %v667 = vpack.c.b16 %v481, %v475
    %v668 = vpack.c.b16 %v482, %v476
    %v669 = vpack.c.b16 %v483, %v477
    %v670 = vpack.c.b16 %v484, %v478
    %v671 = vpack.c.b16 %v485, %v479
    %v672 = vpack.c.b16 %v486, %v480
    %v673 = vpack.c.b16 %v493, %v487
    %v674 = vpack.c.b16 %v494, %v488
    %v675 = vpack.c.b16 %v495, %v489
    %v676 = vpack.c.b16 %v496, %v490
    %v677 = vpack.c.b16 %v497, %v491
    %v678 = vpack.c.b16 %v498, %v492
    %v679 = vpack.c.b16 %v505, %v499
    %v680 = vpack.c.b16 %v506, %v500
    %v681 = vpack.c.b16 %v507, %v501
    %v682 = vpack.c.b16 %v508, %v502
    %v683 = vpack.c.b16 %v509, %v503
    %v684 = vpack.c.b16 %v510, %v504
    %v685 = vpack.c.b16 %v517, %v511
    %v686 = vpack.c.b16 %v518, %v512
    %v687 = vpack.c.b16 %v519, %v513
    %v688 = vpack.c.b16 %v520, %v514
    %v689 = vpack.c.b16 %v521, %v515
    %v690 = vpack.c.b16 %v522, %v516
    %v691 = vpack.c.b16 %v529, %v523
    %v692 = vpack.c.b16 %v530, %v524
    %v693 = vpack.c.b16 %v531, %v525
    %v694 = vpack.c.b16 %v532, %v526
    %v695 = vpack.c.b16 %v533, %v527
    %v696 = vpack.c.b16 %v534, %v528
    %v697 = vpack.c.b16 %v541, %v535
    %v698 = vpack.c.b16 %v542, %v536
    %v699 = vpack.c.b16 %v543, %v537
    %v700 = vpack.c.b16 %v544, %v538
    %v701 = vpack.c.b16 %v545, %v539
    %v702 = vpack.c.b16 %v546, %v540
    %v703 = vpack.c.b16 %v553, %v547
    %v704 = vpack.c.b16 %v554, %v548
    %v705 = vpack.c.b16 %v555, %v549
    %v706 = vpack.c.b16 %v556, %v550
    %v707 = vpack.c.b16 %v557, %v551
    %v708 = vpack.c.b16 %v558, %v552
    %v709 = vpack.c.b16 %v565, %v559
    %v710 = vpack.c.b16 %v566, %v560
    %v711 = vpack.c.b16 %v567, %v561
    %v712 = vpack.c.b16 %v568, %v562
    %v713 = vpack.c.b16 %v569, %v563
    %v714 = vpack.c.b16 %v570, %v564
    %v715 = vpack.c.b16 %v577, %v571
    %v716 = vpack.c.b16 %v578, %v572
    %v717 = vpack.c.b16 %v579, %v573
    %v718 = vpack.c.b16 %v580, %v574
    %v719 = vpack.c.b16 %v581, %v575
    %v720 = vpack.c.b16 %v582, %v576
    %v721 = vpack.c.b16 %v589, %v583
    %v722 = vpack.c.b16 %v590, %v584
    %v723 = vpack.c.b16 %v591, %v585
    %v724 = vpack.c.b16 %v592, %v586
    %v725 = vpack.c.b16 %v593, %v587
    %v726 = vpack.c.b16 %v594, %v588
    %v727 = vpack.c.b16 %v601, %v595
    %v728 = vpack.c.b16 %v602, %v596
    %v729 = vpack.c.b16 %v603, %v597
    %v730 = vpack.c.b16 %v604, %v598
    %v731 = vpack.c.b16 %v605, %v599
    %v732 = vpack.c.b16 %v606, %v600
    %v733 = vpack.c.b16 %v613, %v607
    %v734 = vpack.c.b16 %v614, %v608
    %v735 = vpack.c.b16 %v615, %v609
    %v736 = vpack.c.b16 %v616, %v610
    %v737 = vpack.c.b16 %v617, %v611
    %v738 = vpack.c.b16 %v618, %v612
    %v739 = vpack.c.b16 %v625, %v619
    %v740 = vpack.c.b16 %v626, %v620
    %v741 = vpack.c.b16 %v627, %v621
    %v742 = vpack.c.b16 %v628, %v622
    %v743 = vpack.c.b16 %v629, %v623
    %v744 = vpack.c.b16 %v630, %v624
    %v745 = vpack.c.b16 %v637, %v631
    %v746 = vpack.c.b16 %v638, %v632
    %v747 = vpack.c.b16 %v639, %v633
    %v748 = vpack.c.b16 %v640, %v634
    %v749 = vpack.c.b16 %v641, %v635
    %v750 = vpack.c.b16 %v642, %v636
    %v751 = vpack.c.b16 %v649, %v643
    %v752 = vpack.c.b16 %v650, %v644
    %v753 = vpack.c.b16 %v651, %v645
    %v754 = vpack.c.b16 %v652, %v646
    %v755 = vpack.c.b16 %v653, %v647
    %v756 = vpack.c.b16 %v654, %v648
    %v757 = vpack.c.b16 %v661, %v655
    %v758 = vpack.c.b16 %v662, %v656
    %v759 = vpack.c.b16 %v663, %v657
    %v760 = vpack.c.b16 %v664, %v658
    %v761 = vpack.c.b16 %v665, %v659
    %v762 = vpack.c.b16 %v666, %v660
    %v907 = vunpack.c.l.b16 %v331
    %v908 = vunpack.c.h.b16 %v331
    %v909 = vunpack.c.l.b16 %v332
    %v910 = vunpack.c.h.b16 %v332
    %v911 = vunpack.c.l.b16 %v333
    %v912 = vunpack.c.h.b16 %v333
    %v913 = vunpack.c.l.b16 %v334
    %v914 = vunpack.c.h.b16 %v334
    %v915 = vunpack.c.l.b16 %v335
    %v916 = vunpack.c.h.b16 %v335
    %v917 = vunpack.c.l.b16 %v336
    %v918 = vunpack.c.h.b16 %v336
    %v919 = vunpack.c.l.b16 %v337
    %v920 = vunpack.c.h.b16 %v337
    %v921 = vunpack.c.l.b16 %v338
    %v922 = vunpack.c.h.b16 %v338
    %v923 = vunpack.c.l.b16 %v339
    %v924 = vunpack.c.h.b16 %v339
    %v925 = vunpack.c.l.b16 %v340
    %v926 = vunpack.c.h.b16 %v340
    %v927 = vunpack.c.l.b16 %v341
    %v928 = vunpack.c.h.b16 %v341
    %v929 = vunpack.c.l.b16 %v342
    %v930 = vunpack.c.h.b16 %v342
    %v931 = vunpack.c.l.b16 %v343
    %v932 = vunpack.c.h.b16 %v343
    %v933 = vunpack.c.l.b16 %v344
    %v934 = vunpack.c.h.b16 %v344
    %v935 = vunpack.c.l.b16 %v345
    %v936 = vunpack.c.h.b16 %v345
    %v937 = vunpack.c.l.b16 %v346
    %v938 = vunpack.c.h.b16 %v346
    %v939 = vunpack.c.l.b16 %v347
    %v940 = vunpack.c.h.b16 %v347
    %v941 = vunpack.c.l.b16 %v348
    %v942 = vunpack.c.h.b16 %v348
    %v943 = vunpack.c.l.b16 %v349
    %v944 = vunpack.c.h.b16 %v349
    %v945 = vunpack.c.l.b16 %v350
    %v946 = vunpack.c.h.b16 %v350
    %v947 = vunpack.c.l.b16 %v351
    %v948 = vunpack.c.h.b16 %v351
    %v949 = vunpack.c.l.b16 %v352
    %v950 = vunpack.c.h.b16 %v352
    %v951 = vunpack.c.l.b16 %v353
    %v952 = vunpack.c.h.b16 %v353
    %v953 = vunpack.c.l.b16 %v354
    %v954 = vunpack.c.h.b16 %v354
    %v955 = vunpack.c.l.b16 %v355
    %v956 = vunpack.c.h.b16 %v355
    %v957 = vunpack.c.l.b16 %v356
    %v958 = vunpack.c.h.b16 %v356
    %v959 = vunpack.c.l.b16 %v357
    %v960 = vunpack.c.h.b16 %v357
    %v961 = vunpack.c.l.b16 %v358
    %v962 = vunpack.c.h.b16 %v358
    %v963 = vunpack.c.l.b16 %v359
    %v964 = vunpack.c.h.b16 %v359
    %v965 = vunpack.c.l.b16 %v360
    %v966 = vunpack.c.h.b16 %v360
    %v967 = vunpack.c.l.b16 %v361
    %v968 = vunpack.c.h.b16 %v361
    %v969 = vunpack.c.l.b16 %v362
    %v970 = vunpack.c.h.b16 %v362
    %v971 = vunpack.c.l.b16 %v363
    %v972 = vunpack.c.h.b16 %v363
    %v973 = vunpack.c.l.b16 %v364
    %v974 = vunpack.c.h.b16 %v364
    %v975 = vunpack.c.l.b16 %v365
    %v976 = vunpack.c.h.b16 %v365
    %v977 = vunpack.c.l.b16 %v366
    %v978 = vunpack.c.h.b16 %v366
    %v979 = vunpack.c.l.b16 %v367
    %v980 = vunpack.c.h.b16 %v367
    %v981 = vunpack.c.l.b16 %v368
    %v982 = vunpack.c.h.b16 %v368
    %v983 = vunpack.c.l.b16 %v369
    %v984 = vunpack.c.h.b16 %v369
    %v985 = vunpack.c.l.b16 %v370
    %v986 = vunpack.c.h.b16 %v370
    %v987 = vunpack.c.l.b16 %v371
    %v988 = vunpack.c.h.b16 %v371
    %v989 = vunpack.c.l.b16 %v372
    %v990 = vunpack.c.h.b16 %v372
    %v991 = vunpack.c.l.b16 %v373
    %v992 = vunpack.c.h.b16 %v373
    %v993 = vunpack.c.l.b16 %v374
    %v994 = vunpack.c.h.b16 %v374
    %v995 = vunpack.c.l.b16 %v375
    %v996 = vunpack.c.h.b16 %v375
    %v997 = vunpack.c.l.b16 %v376
    %v998 = vunpack.c.h.b16 %v376
    %v999 = vunpack.c.l.b16 %v377
    %v1000 = vunpack.c.h.b16 %v377
    %v1001 = vunpack.c.l.b16 %v378
    %v1002 = vunpack.c.h.b16 %v378
    %v1003 = vpack.c.b16 %v913, %v907
    %v1004 = vpack.c.b16 %v914, %v908
    %v1005 = vpack.c.b16 %v915, %v909
    %v1006 = vpack.c.b16 %v916, %v910
    %v1007 = vpack.c.b16 %v917, %v911
    %v1008 = vpack.c.b16 %v918, %v912
    %v1009 = vpack.c.b16 %v925, %v919
    %v1010 = vpack.c.b16 %v926, %v920
    %v1011 = vpack.c.b16 %v927, %v921
    %v1012 = vpack.c.b16 %v928, %v922
    %v1013 = vpack.c.b16 %v929, %v923
    %v1014 = vpack.c.b16 %v930, %v924
    %v1015 = vpack.c.b16 %v937, %v931
    %v1016 = vpack.c.b16 %v938, %v932
    %v1017 = vpack.c.b16 %v939, %v933
    %v1018 = vpack.c.b16 %v940, %v934
    %v1019 = vpack.c.b16 %v941, %v935
    %v1020 = vpack.c.b16 %v942, %v936
    %v1021 = vpack.c.b16 %v949, %v943
    %v1022 = vpack.c.b16 %v950, %v944
    %v1023 = vpack.c.b16 %v951, %v945
    %v1024 = vpack.c.b16 %v952, %v946
    %v1025 = vpack.c.b16 %v953, %v947
    %v1026 = vpack.c.b16 %v954, %v948
    %v1027 = vpack.c.b16 %v961, %v955
    %v1028 = vpack.c.b16 %v962, %v956
    %v1029 = vpack.c.b16 %v963, %v957
    %v1030 = vpack.c.b16 %v964, %v958
    %v1031 = vpack.c.b16 %v965, %v959
    %v1032 = vpack.c.b16 %v966, %v960
    %v1033 = vpack.c.b16 %v973, %v967
    %v1034 = vpack.c.b16 %v974, %v968
    %v1035 = vpack.c.b16 %v975, %v969
    %v1036 = vpack.c.b16 %v976, %v970
    %v1037 = vpack.c.b16 %v977, %v971
    %v1038 = vpack.c.b16 %v978, %v972
    %v1039 = vpack.c.b16 %v985, %v979
    %v1040 = vpack.c.b16 %v986, %v980
    %v1041 = vpack.c.b16 %v987, %v981
    %v1042 = vpack.c.b16 %v988, %v982
    %v1043 = vpack.c.b16 %v989, %v983
    %v1044 = vpack.c.b16 %v990, %v984
    %v1045 = vpack.c.b16 %v997, %v991
    %v1046 = vpack.c.b16 %v998, %v992
    %v1047 = vpack.c.b16 %v999, %v993
    %v1048 = vpack.c.b16 %v1000, %v994
    %v1049 = vpack.c.b16 %v1001, %v995
    %v1050 = vpack.c.b16 %v1002, %v996
    %1099 = vmatprep.subr.bf16.mxu0 %v1004
    %1100 = vmatpush1.bf16.xpose.msra.mxu0 %v1003
    %1101 = vmatprep.subr.bf16.mxu0 %v1010
    %1102 = vmatpush1.bf16.xpose.msra.mxu0 %v1009
    %1103 = vmatprep.subr.bf16.mxu0 %v1016
    %1104 = vmatpush1.bf16.xpose.msra.mxu0 %v1015
    %1105 = vmatprep.subr.bf16.mxu0 %v1022
    %1106 = vmatpush1.bf16.xpose.msra.mxu0 %v1021
    %1107 = vmatprep.subr.bf16.mxu0 %v1028
    %1108 = vmatpush1.bf16.xpose.msra.mxu0 %v1027
    %1109 = vmatprep.subr.bf16.mxu0 %v1034
    %1110 = vmatpush1.bf16.xpose.msra.mxu0 %v1033
    %1111 = vmatprep.subr.bf16.mxu0 %v1040
    %1112 = vmatpush1.bf16.xpose.msra.mxu0 %v1039
    %1113 = vmatprep.subr.bf16.mxu0 %v1046
    %1114 = vmatpush1.bf16.xpose.msra.mxu0 %v1045
    %1115 = vmatprep.subr.bf16.mxu0 0
    %1116 = vmatpush1.bf16.xpose.msra.mxu0 0
    %1117 = vmatprep.subr.bf16.mxu0 0
    %1118 = vmatpush1.bf16.xpose.msra.mxu0 0
    %1119 = vmatprep.subr.bf16.mxu0 0
    %1120 = vmatpush1.bf16.xpose.msra.mxu0 0
    %1121 = vmatprep.subr.bf16.mxu0 0
    %1122 = vmatpush1.bf16.xpose.msra.mxu0 0
    %1123 = vmatprep.subr.bf16.mxu0 0
    %1124 = vmatpush1.bf16.xpose.msra.mxu0 0
    %1125 = vmatprep.subr.bf16.mxu0 0
    %1126 = vmatpush1.bf16.xpose.msra.mxu0 0
    %1127 = vmatprep.subr.bf16.mxu0 0
    %1128 = vmatpush1.bf16.xpose.msra.mxu0 0
    %1129 = vmatprep.subr.bf16.mxu0 0
    %1130 = vmatpush1.bf16.xpose.msra.mxu0 0
    %1131 = vmatprep.mubr.bf16.mxu0 %v668
    %1132 = vmatmul.mubr.bf16.gmra.mrb[0].mxu0 %v667
    %v1133 = vpop.f32.mrb[0].mxu0
    %v1134 = vadd.f32 0.0, %v1133
    %v1135 = vpop.f32.mrb[0].mxu0
    %v1136 = vpop.f32.mrb[0].mxu0
    %v1137 = vadd.f32 0.0, %v1136
    %v1138 = vpop.f32.mrb[0].mxu0
    %1139 = vmatprep.mubr.bf16.mxu0 %v674
    %1140 = vmatmul.mubr.bf16.gmra.mrb[0].mxu0 %v673
    %v1141 = vpop.f32.mrb[0].mxu0
    %v1142 = vadd.f32 0.0, %v1141
    %v1143 = vpop.f32.mrb[0].mxu0
    %v1144 = vpop.f32.mrb[0].mxu0
    %v1145 = vadd.f32 0.0, %v1144
    %v1146 = vpop.f32.mrb[0].mxu0
    %1147 = vmatprep.mubr.bf16.mxu0 %v680
    %1148 = vmatmul.mubr.bf16.gmra.mrb[0].mxu0 %v679
    %v1149 = vpop.f32.mrb[0].mxu0
    %v1150 = vadd.f32 0.0, %v1149
    %v1151 = vpop.f32.mrb[0].mxu0
    %v1152 = vpop.f32.mrb[0].mxu0
    %v1153 = vadd.f32 0.0, %v1152
    %v1154 = vpop.f32.mrb[0].mxu0
    %1155 = vmatprep.mubr.bf16.mxu0 %v686
    %1156 = vmatmul.mubr.bf16.gmra.mrb[0].mxu0 %v685
    %v1157 = vpop.f32.mrb[0].mxu0
    %v1158 = vadd.f32 0.0, %v1157
    %v1159 = vpop.f32.mrb[0].mxu0
    %v1160 = vpop.f32.mrb[0].mxu0
    %v1161 = vadd.f32 0.0, %v1160
    %v1162 = vpop.f32.mrb[0].mxu0
    %1163 = vmatprep.mubr.bf16.mxu0 %v692
    %1164 = vmatmul.mubr.bf16.gmra.mrb[0].mxu0 %v691
    %v1165 = vpop.f32.mrb[0].mxu0
    %v1166 = vadd.f32 0.0, %v1165
    %v1167 = vpop.f32.mrb[0].mxu0
    %v1168 = vpop.f32.mrb[0].mxu0
    %v1169 = vadd.f32 0.0, %v1168
    %v1170 = vpop.f32.mrb[0].mxu0
    %1171 = vmatprep.mubr.bf16.mxu0 %v698
    %1172 = vmatmul.mubr.bf16.gmra.mrb[0].mxu0 %v697
    %v1173 = vpop.f32.mrb[0].mxu0
    %v1174 = vadd.f32 0.0, %v1173
    %v1175 = vpop.f32.mrb[0].mxu0
    %v1176 = vpop.f32.mrb[0].mxu0
    %v1177 = vadd.f32 0.0, %v1176
    %v1178 = vpop.f32.mrb[0].mxu0
    %1179 = vmatprep.mubr.bf16.mxu0 %v704
    %1180 = vmatmul.mubr.bf16.gmra.mrb[0].mxu0 %v703
    %v1181 = vpop.f32.mrb[0].mxu0
    %v1182 = vadd.f32 0.0, %v1181
    %v1183 = vpop.f32.mrb[0].mxu0
    %v1184 = vpop.f32.mrb[0].mxu0
    %v1185 = vadd.f32 0.0, %v1184
    %v1186 = vpop.f32.mrb[0].mxu0
    %1187 = vmatprep.mubr.bf16.mxu0 %v710
    %1188 = vmatmul.mubr.bf16.gmra.mrb[0].mxu0 %v709
    %v1189 = vpop.f32.mrb[0].mxu0
    %v1190 = vadd.f32 0.0, %v1189
    %v1191 = vpop.f32.mrb[0].mxu0
    %v1192 = vpop.f32.mrb[0].mxu0
    %v1193 = vadd.f32 0.0, %v1192
    %v1194 = vpop.f32.mrb[0].mxu0
    %1195 = vmatprep.mubr.bf16.mxu0 %v716
    %1196 = vmatmul.mubr.bf16.gmra.mrb[0].mxu0 %v715
    %v1197 = vpop.f32.mrb[0].mxu0
    %v1198 = vadd.f32 0.0, %v1197
    %v1199 = vpop.f32.mrb[0].mxu0
    %v1200 = vpop.f32.mrb[0].mxu0
    %v1201 = vadd.f32 0.0, %v1200
    %v1202 = vpop.f32.mrb[0].mxu0
    %1203 = vmatprep.mubr.bf16.mxu0 %v722
    %1204 = vmatmul.mubr.bf16.gmra.mrb[0].mxu0 %v721
    %v1205 = vpop.f32.mrb[0].mxu0
    %v1206 = vadd.f32 0.0, %v1205
    %v1207 = vpop.f32.mrb[0].mxu0
    %v1208 = vpop.f32.mrb[0].mxu0
    %v1209 = vadd.f32 0.0, %v1208
    %v1210 = vpop.f32.mrb[0].mxu0
    %1211 = vmatprep.mubr.bf16.mxu0 %v728
    %1212 = vmatmul.mubr.bf16.gmra.mrb[0].mxu0 %v727
    %v1213 = vpop.f32.mrb[0].mxu0
    %v1214 = vadd.f32 0.0, %v1213
    %v1215 = vpop.f32.mrb[0].mxu0
    %v1216 = vpop.f32.mrb[0].mxu0
    %v1217 = vadd.f32 0.0, %v1216
    %v1218 = vpop.f32.mrb[0].mxu0
    %1219 = vmatprep.mubr.bf16.mxu0 %v734
    %1220 = vmatmul.mubr.bf16.gmra.mrb[0].mxu0 %v733
    %v1221 = vpop.f32.mrb[0].mxu0
    %v1222 = vadd.f32 0.0, %v1221
    %v1223 = vpop.f32.mrb[0].mxu0
    %v1224 = vpop.f32.mrb[0].mxu0
    %v1225 = vadd.f32 0.0, %v1224
    %v1226 = vpop.f32.mrb[0].mxu0
    %1227 = vmatprep.mubr.bf16.mxu0 %v740
    %1228 = vmatmul.mubr.bf16.gmra.mrb[0].mxu0 %v739
    %v1229 = vpop.f32.mrb[0].mxu0
    %v1230 = vadd.f32 0.0, %v1229
    %v1231 = vpop.f32.mrb[0].mxu0
    %v1232 = vpop.f32.mrb[0].mxu0
    %v1233 = vadd.f32 0.0, %v1232
    %v1234 = vpop.f32.mrb[0].mxu0
    %1235 = vmatprep.mubr.bf16.mxu0 %v746
    %1236 = vmatmul.mubr.bf16.gmra.mrb[0].mxu0 %v745
    %v1237 = vpop.f32.mrb[0].mxu0
    %v1238 = vadd.f32 0.0, %v1237
    %v1239 = vpop.f32.mrb[0].mxu0
    %v1240 = vpop.f32.mrb[0].mxu0
    %v1241 = vadd.f32 0.0, %v1240
    %v1242 = vpop.f32.mrb[0].mxu0
    %1243 = vmatprep.mubr.bf16.mxu0 %v752
    %1244 = vmatmul.mubr.bf16.gmra.mrb[0].mxu0 %v751
    %v1245 = vpop.f32.mrb[0].mxu0
    %v1246 = vadd.f32 0.0, %v1245
    %v1247 = vpop.f32.mrb[0].mxu0
    %v1248 = vpop.f32.mrb[0].mxu0
    %v1249 = vadd.f32 0.0, %v1248
    %v1250 = vpop.f32.mrb[0].mxu0
    %1251 = vmatprep.mubr.bf16.mxu0 %v758
    %1252 = vmatmul.mubr.bf16.gmra.mrb[0].mxu0 %v757
    %v1253 = vpop.f32.mrb[0].mxu0
    %v1254 = vadd.f32 0.0, %v1253
    %v1255 = vpop.f32.mrb[0].mxu0
    %v1256 = vpop.f32.mrb[0].mxu0
    %v1257 = vadd.f32 0.0, %v1256
    %v1258 = vpop.f32.mrb[0].mxu0
    %1259 = vdwg.mxu0
    %1260 = vmatprep.subr.bf16.mxu0 %v1006
    %1261 = vmatpush1.bf16.xpose.msra.mxu0 %v1005
    %1262 = vmatprep.subr.bf16.mxu0 %v1012
    %1263 = vmatpush1.bf16.xpose.msra.mxu0 %v1011
    %1264 = vmatprep.subr.bf16.mxu0 %v1018
    %1265 = vmatpush1.bf16.xpose.msra.mxu0 %v1017
    %1266 = vmatprep.subr.bf16.mxu0 %v1024
    %1267 = vmatpush1.bf16.xpose.msra.mxu0 %v1023
    %1268 = vmatprep.subr.bf16.mxu0 %v1030
    %1269 = vmatpush1.bf16.xpose.msra.mxu0 %v1029
    %1270 = vmatprep.subr.bf16.mxu0 %v1036
    %1271 = vmatpush1.bf16.xpose.msra.mxu0 %v1035
    %1272 = vmatprep.subr.bf16.mxu0 %v1042
    %1273 = vmatpush1.bf16.xpose.msra.mxu0 %v1041
    %1274 = vmatprep.subr.bf16.mxu0 %v1048
    %1275 = vmatpush1.bf16.xpose.msra.mxu0 %v1047
    %1276 = vmatprep.subr.bf16.mxu0 0
    %1277 = vmatpush1.bf16.xpose.msra.mxu0 0
    %1278 = vmatprep.subr.bf16.mxu0 0
    %1279 = vmatpush1.bf16.xpose.msra.mxu0 0
    %1280 = vmatprep.subr.bf16.mxu0 0
    %1281 = vmatpush1.bf16.xpose.msra.mxu0 0
    %1282 = vmatprep.subr.bf16.mxu0 0
    %1283 = vmatpush1.bf16.xpose.msra.mxu0 0
    %1284 = vmatprep.subr.bf16.mxu0 0
    %1285 = vmatpush1.bf16.xpose.msra.mxu0 0
    %1286 = vmatprep.subr.bf16.mxu0 0
    %1287 = vmatpush1.bf16.xpose.msra.mxu0 0
    %1288 = vmatprep.subr.bf16.mxu0 0
    %1289 = vmatpush1.bf16.xpose.msra.mxu0 0
    %1290 = vmatprep.subr.bf16.mxu0 0
    %1291 = vmatpush1.bf16.xpose.msra.mxu0 0
    %1292 = vmatprep.mubr.bf16.mxu0 %v670
    %1293 = vmatmul.mubr.bf16.gmra.mrb[0].mxu0 %v669
    %v1294 = vpop.f32.mrb[0].mxu0
    %v1295 = vadd.f32 %v1134, %v1294
    %v1296 = vpop.f32.mrb[0].mxu0
    %v1297 = vpop.f32.mrb[0].mxu0
    %v1298 = vadd.f32 %v1137, %v1297
    %v1299 = vpop.f32.mrb[0].mxu0
    %1300 = vmatprep.mubr.bf16.mxu0 %v676
    %1301 = vmatmul.mubr.bf16.gmra.mrb[0].mxu0 %v675
    %v1302 = vpop.f32.mrb[0].mxu0
    %v1303 = vadd.f32 %v1142, %v1302
    %v1304 = vpop.f32.mrb[0].mxu0
    %v1305 = vpop.f32.mrb[0].mxu0
    %v1306 = vadd.f32 %v1145, %v1305
    %v1307 = vpop.f32.mrb[0].mxu0
    %1308 = vmatprep.mubr.bf16.mxu0 %v682
    %1309 = vmatmul.mubr.bf16.gmra.mrb[0].mxu0 %v681
    %v1310 = vpop.f32.mrb[0].mxu0
    %v1311 = vadd.f32 %v1150, %v1310
    %v1312 = vpop.f32.mrb[0].mxu0
    %v1313 = vpop.f32.mrb[0].mxu0
    %v1314 = vadd.f32 %v1153, %v1313
    %v1315 = vpop.f32.mrb[0].mxu0
    %1316 = vmatprep.mubr.bf16.mxu0 %v688
    %1317 = vmatmul.mubr.bf16.gmra.mrb[0].mxu0 %v687
    %v1318 = vpop.f32.mrb[0].mxu0
    %v1319 = vadd.f32 %v1158, %v1318
    %v1320 = vpop.f32.mrb[0].mxu0
    %v1321 = vpop.f32.mrb[0].mxu0
    %v1322 = vadd.f32 %v1161, %v1321
    %v1323 = vpop.f32.mrb[0].mxu0
    %1324 = vmatprep.mubr.bf16.mxu0 %v694
    %1325 = vmatmul.mubr.bf16.gmra.mrb[0].mxu0 %v693
    %v1326 = vpop.f32.mrb[0].mxu0
    %v1327 = vadd.f32 %v1166, %v1326
    %v1328 = vpop.f32.mrb[0].mxu0
    %v1329 = vpop.f32.mrb[0].mxu0
    %v1330 = vadd.f32 %v1169, %v1329
    %v1331 = vpop.f32.mrb[0].mxu0
    %1332 = vmatprep.mubr.bf16.mxu0 %v700
    %1333 = vmatmul.mubr.bf16.gmra.mrb[0].mxu0 %v699
    %v1334 = vpop.f32.mrb[0].mxu0
    %v1335 = vadd.f32 %v1174, %v1334
    %v1336 = vpop.f32.mrb[0].mxu0
    %v1337 = vpop.f32.mrb[0].mxu0
    %v1338 = vadd.f32 %v1177, %v1337
    %v1339 = vpop.f32.mrb[0].mxu0
    %1340 = vmatprep.mubr.bf16.mxu0 %v706
    %1341 = vmatmul.mubr.bf16.gmra.mrb[0].mxu0 %v705
    %v1342 = vpop.f32.mrb[0].mxu0
    %v1343 = vadd.f32 %v1182, %v1342
    %v1344 = vpop.f32.mrb[0].mxu0
    %v1345 = vpop.f32.mrb[0].mxu0
    %v1346 = vadd.f32 %v1185, %v1345
    %v1347 = vpop.f32.mrb[0].mxu0
    %1348 = vmatprep.mubr.bf16.mxu0 %v712
    %1349 = vmatmul.mubr.bf16.gmra.mrb[0].mxu0 %v711
    %v1350 = vpop.f32.mrb[0].mxu0
    %v1351 = vadd.f32 %v1190, %v1350
    %v1352 = vpop.f32.mrb[0].mxu0
    %v1353 = vpop.f32.mrb[0].mxu0
    %v1354 = vadd.f32 %v1193, %v1353
    %v1355 = vpop.f32.mrb[0].mxu0
    %1356 = vmatprep.mubr.bf16.mxu0 %v718
    %1357 = vmatmul.mubr.bf16.gmra.mrb[0].mxu0 %v717
    %v1358 = vpop.f32.mrb[0].mxu0
    %v1359 = vadd.f32 %v1198, %v1358
    %v1360 = vpop.f32.mrb[0].mxu0
    %v1361 = vpop.f32.mrb[0].mxu0
    %v1362 = vadd.f32 %v1201, %v1361
    %v1363 = vpop.f32.mrb[0].mxu0
    %1364 = vmatprep.mubr.bf16.mxu0 %v724
    %1365 = vmatmul.mubr.bf16.gmra.mrb[0].mxu0 %v723
    %v1366 = vpop.f32.mrb[0].mxu0
    %v1367 = vadd.f32 %v1206, %v1366
    %v1368 = vpop.f32.mrb[0].mxu0
    %v1369 = vpop.f32.mrb[0].mxu0
    %v1370 = vadd.f32 %v1209, %v1369
    %v1371 = vpop.f32.mrb[0].mxu0
    %1372 = vmatprep.mubr.bf16.mxu0 %v730
    %1373 = vmatmul.mubr.bf16.gmra.mrb[0].mxu0 %v729
    %v1374 = vpop.f32.mrb[0].mxu0
    %v1375 = vadd.f32 %v1214, %v1374
    %v1376 = vpop.f32.mrb[0].mxu0
    %v1377 = vpop.f32.mrb[0].mxu0
    %v1378 = vadd.f32 %v1217, %v1377
    %v1379 = vpop.f32.mrb[0].mxu0
    %1380 = vmatprep.mubr.bf16.mxu0 %v736
    %1381 = vmatmul.mubr.bf16.gmra.mrb[0].mxu0 %v735
    %v1382 = vpop.f32.mrb[0].mxu0
    %v1383 = vadd.f32 %v1222, %v1382
    %v1384 = vpop.f32.mrb[0].mxu0
    %v1385 = vpop.f32.mrb[0].mxu0
    %v1386 = vadd.f32 %v1225, %v1385
    %v1387 = vpop.f32.mrb[0].mxu0
    %1388 = vmatprep.mubr.bf16.mxu0 %v742
    %1389 = vmatmul.mubr.bf16.gmra.mrb[0].mxu0 %v741
    %v1390 = vpop.f32.mrb[0].mxu0
    %v1391 = vadd.f32 %v1230, %v1390
    %v1392 = vpop.f32.mrb[0].mxu0
    %v1393 = vpop.f32.mrb[0].mxu0
    %v1394 = vadd.f32 %v1233, %v1393
    %v1395 = vpop.f32.mrb[0].mxu0
    %1396 = vmatprep.mubr.bf16.mxu0 %v748
    %1397 = vmatmul.mubr.bf16.gmra.mrb[0].mxu0 %v747
    %v1398 = vpop.f32.mrb[0].mxu0
    %v1399 = vadd.f32 %v1238, %v1398
    %v1400 = vpop.f32.mrb[0].mxu0
    %v1401 = vpop.f32.mrb[0].mxu0
    %v1402 = vadd.f32 %v1241, %v1401
    %v1403 = vpop.f32.mrb[0].mxu0
    %1404 = vmatprep.mubr.bf16.mxu0 %v754
    %1405 = vmatmul.mubr.bf16.gmra.mrb[0].mxu0 %v753
    %v1406 = vpop.f32.mrb[0].mxu0
    %v1407 = vadd.f32 %v1246, %v1406
    %v1408 = vpop.f32.mrb[0].mxu0
    %v1409 = vpop.f32.mrb[0].mxu0
    %v1410 = vadd.f32 %v1249, %v1409
    %v1411 = vpop.f32.mrb[0].mxu0
    %1412 = vmatprep.mubr.bf16.mxu0 %v760
    %1413 = vmatmul.mubr.bf16.gmra.mrb[0].mxu0 %v759
    %v1414 = vpop.f32.mrb[0].mxu0
    %v1415 = vadd.f32 %v1254, %v1414
    %v1416 = vpop.f32.mrb[0].mxu0
    %v1417 = vpop.f32.mrb[0].mxu0
    %v1418 = vadd.f32 %v1257, %v1417
    %v1419 = vpop.f32.mrb[0].mxu0
    %1420 = vdwg.mxu0
    %1421 = vmatprep.subr.bf16.mxu0 %v1008
    %1422 = vmatpush1.bf16.xpose.msra.mxu0 %v1007
    %1423 = vmatprep.subr.bf16.mxu0 %v1014
    %1424 = vmatpush1.bf16.xpose.msra.mxu0 %v1013
    %1425 = vmatprep.subr.bf16.mxu0 %v1020
    %1426 = vmatpush1.bf16.xpose.msra.mxu0 %v1019
    %1427 = vmatprep.subr.bf16.mxu0 %v1026
    %1428 = vmatpush1.bf16.xpose.msra.mxu0 %v1025
    %1429 = vmatprep.subr.bf16.mxu0 %v1032
    %1430 = vmatpush1.bf16.xpose.msra.mxu0 %v1031
    %1431 = vmatprep.subr.bf16.mxu0 %v1038
    %1432 = vmatpush1.bf16.xpose.msra.mxu0 %v1037
    %1433 = vmatprep.subr.bf16.mxu0 %v1044
    %1434 = vmatpush1.bf16.xpose.msra.mxu0 %v1043
    %1435 = vmatprep.subr.bf16.mxu0 %v1050
    %1436 = vmatpush1.bf16.xpose.msra.mxu0 %v1049
    %1437 = vmatprep.subr.bf16.mxu0 0
    %1438 = vmatpush1.bf16.xpose.msra.mxu0 0
    %1439 = vmatprep.subr.bf16.mxu0 0
    %1440 = vmatpush1.bf16.xpose.msra.mxu0 0
    %1441 = vmatprep.subr.bf16.mxu0 0
    %1442 = vmatpush1.bf16.xpose.msra.mxu0 0
    %1443 = vmatprep.subr.bf16.mxu0 0
    %1444 = vmatpush1.bf16.xpose.msra.mxu0 0
    %1445 = vmatprep.subr.bf16.mxu0 0
    %1446 = vmatpush1.bf16.xpose.msra.mxu0 0
    %1447 = vmatprep.subr.bf16.mxu0 0
    %1448 = vmatpush1.bf16.xpose.msra.mxu0 0
    %1449 = vmatprep.subr.bf16.mxu0 0
    %1450 = vmatpush1.bf16.xpose.msra.mxu0 0
    %1451 = vmatprep.subr.bf16.mxu0 0
    %1452 = vmatpush1.bf16.xpose.msra.mxu0 0
    %1453 = vmatprep.mubr.bf16.mxu0 %v672
    %1454 = vmatmul.mubr.bf16.gmra.mrb[0].mxu0 %v671
    %v1455 = vpop.f32.mrb[0].mxu0
    %v1456 = vadd.f32 %v1295, %v1455
    %v1457 = vpop.f32.mrb[0].mxu0
    %v1458 = vpop.f32.mrb[0].mxu0
    %v1459 = vadd.f32 %v1298, %v1458
    %v1460 = vpop.f32.mrb[0].mxu0
    %1461 = vmatprep.mubr.bf16.mxu0 %v678
    %1462 = vmatmul.mubr.bf16.gmra.mrb[0].mxu0 %v677
    %v1463 = vpop.f32.mrb[0].mxu0
    %v1464 = vadd.f32 %v1303, %v1463
    %v1465 = vpop.f32.mrb[0].mxu0
    %v1466 = vpop.f32.mrb[0].mxu0
    %v1467 = vadd.f32 %v1306, %v1466
    %v1468 = vpop.f32.mrb[0].mxu0
    %1469 = vmatprep.mubr.bf16.mxu0 %v684
    %1470 = vmatmul.mubr.bf16.gmra.mrb[0].mxu0 %v683
    %v1471 = vpop.f32.mrb[0].mxu0
    %v1472 = vadd.f32 %v1311, %v1471
    %v1473 = vpop.f32.mrb[0].mxu0
    %v1474 = vpop.f32.mrb[0].mxu0
    %v1475 = vadd.f32 %v1314, %v1474
    %v1476 = vpop.f32.mrb[0].mxu0
    %1477 = vmatprep.mubr.bf16.mxu0 %v690
    %1478 = vmatmul.mubr.bf16.gmra.mrb[0].mxu0 %v689
    %v1479 = vpop.f32.mrb[0].mxu0
    %v1480 = vadd.f32 %v1319, %v1479
    %v1481 = vpop.f32.mrb[0].mxu0
    %v1482 = vpop.f32.mrb[0].mxu0
    %v1483 = vadd.f32 %v1322, %v1482
    %v1484 = vpop.f32.mrb[0].mxu0
    %1485 = vmatprep.mubr.bf16.mxu0 %v696
    %1486 = vmatmul.mubr.bf16.gmra.mrb[0].mxu0 %v695
    %v1487 = vpop.f32.mrb[0].mxu0
    %v1488 = vadd.f32 %v1327, %v1487
    %v1489 = vpop.f32.mrb[0].mxu0
    %v1490 = vpop.f32.mrb[0].mxu0
    %v1491 = vadd.f32 %v1330, %v1490
    %v1492 = vpop.f32.mrb[0].mxu0
    %1493 = vmatprep.mubr.bf16.mxu0 %v702
    %1494 = vmatmul.mubr.bf16.gmra.mrb[0].mxu0 %v701
    %v1495 = vpop.f32.mrb[0].mxu0
    %v1496 = vadd.f32 %v1335, %v1495
    %v1497 = vpop.f32.mrb[0].mxu0
    %v1498 = vpop.f32.mrb[0].mxu0
    %v1499 = vadd.f32 %v1338, %v1498
    %v1500 = vpop.f32.mrb[0].mxu0
    %1501 = vmatprep.mubr.bf16.mxu0 %v708
    %1502 = vmatmul.mubr.bf16.gmra.mrb[0].mxu0 %v707
    %v1503 = vpop.f32.mrb[0].mxu0
    %v1504 = vadd.f32 %v1343, %v1503
    %v1505 = vpop.f32.mrb[0].mxu0
    %v1506 = vpop.f32.mrb[0].mxu0
    %v1507 = vadd.f32 %v1346, %v1506
    %v1508 = vpop.f32.mrb[0].mxu0
    %1509 = vmatprep.mubr.bf16.mxu0 %v714
    %1510 = vmatmul.mubr.bf16.gmra.mrb[0].mxu0 %v713
    %v1511 = vpop.f32.mrb[0].mxu0
    %v1512 = vadd.f32 %v1351, %v1511
    %v1513 = vpop.f32.mrb[0].mxu0
    %v1514 = vpop.f32.mrb[0].mxu0
    %v1515 = vadd.f32 %v1354, %v1514
    %v1516 = vpop.f32.mrb[0].mxu0
    %1517 = vmatprep.mubr.bf16.mxu0 %v720
    %1518 = vmatmul.mubr.bf16.gmra.mrb[0].mxu0 %v719
    %v1519 = vpop.f32.mrb[0].mxu0
    %v1520 = vadd.f32 %v1359, %v1519
    %v1521 = vpop.f32.mrb[0].mxu0
    %v1522 = vpop.f32.mrb[0].mxu0
    %v1523 = vadd.f32 %v1362, %v1522
    %v1524 = vpop.f32.mrb[0].mxu0
    %1525 = vmatprep.mubr.bf16.mxu0 %v726
    %1526 = vmatmul.mubr.bf16.gmra.mrb[0].mxu0 %v725
    %v1527 = vpop.f32.mrb[0].mxu0
    %v1528 = vadd.f32 %v1367, %v1527
    %v1529 = vpop.f32.mrb[0].mxu0
    %v1530 = vpop.f32.mrb[0].mxu0
    %v1531 = vadd.f32 %v1370, %v1530
    %v1532 = vpop.f32.mrb[0].mxu0
    %1533 = vmatprep.mubr.bf16.mxu0 %v732
    %1534 = vmatmul.mubr.bf16.gmra.mrb[0].mxu0 %v731
    %v1535 = vpop.f32.mrb[0].mxu0
    %v1536 = vadd.f32 %v1375, %v1535
    %v1537 = vpop.f32.mrb[0].mxu0
    %v1538 = vpop.f32.mrb[0].mxu0
    %v1539 = vadd.f32 %v1378, %v1538
    %v1540 = vpop.f32.mrb[0].mxu0
    %1541 = vmatprep.mubr.bf16.mxu0 %v738
    %1542 = vmatmul.mubr.bf16.gmra.mrb[0].mxu0 %v737
    %v1543 = vpop.f32.mrb[0].mxu0
    %v1544 = vadd.f32 %v1383, %v1543
    %v1545 = vpop.f32.mrb[0].mxu0
    %v1546 = vpop.f32.mrb[0].mxu0
    %v1547 = vadd.f32 %v1386, %v1546
    %v1548 = vpop.f32.mrb[0].mxu0
    %1549 = vmatprep.mubr.bf16.mxu0 %v744
    %1550 = vmatmul.mubr.bf16.gmra.mrb[0].mxu0 %v743
    %v1551 = vpop.f32.mrb[0].mxu0
    %v1552 = vadd.f32 %v1391, %v1551
    %v1553 = vpop.f32.mrb[0].mxu0
    %v1554 = vpop.f32.mrb[0].mxu0
    %v1555 = vadd.f32 %v1394, %v1554
    %v1556 = vpop.f32.mrb[0].mxu0
    %1557 = vmatprep.mubr.bf16.mxu0 %v750
    %1558 = vmatmul.mubr.bf16.gmra.mrb[0].mxu0 %v749
    %v1559 = vpop.f32.mrb[0].mxu0
    %v1560 = vadd.f32 %v1399, %v1559
    %v1561 = vpop.f32.mrb[0].mxu0
    %v1562 = vpop.f32.mrb[0].mxu0
    %v1563 = vadd.f32 %v1402, %v1562
    %v1564 = vpop.f32.mrb[0].mxu0
    %1565 = vmatprep.mubr.bf16.mxu0 %v756
    %1566 = vmatmul.mubr.bf16.gmra.mrb[0].mxu0 %v755
    %v1567 = vpop.f32.mrb[0].mxu0
    %v1568 = vadd.f32 %v1407, %v1567
    %v1569 = vpop.f32.mrb[0].mxu0
    %v1570 = vpop.f32.mrb[0].mxu0
    %v1571 = vadd.f32 %v1410, %v1570
    %v1572 = vpop.f32.mrb[0].mxu0
    %1573 = vmatprep.mubr.bf16.mxu0 %v762
    %1574 = vmatmul.mubr.bf16.gmra.mrb[0].mxu0 %v761
    %v1575 = vpop.f32.mrb[0].mxu0
    %v1576 = vadd.f32 %v1415, %v1575
    %v1577 = vpop.f32.mrb[0].mxu0
    %v1578 = vpop.f32.mrb[0].mxu0
    %v1579 = vadd.f32 %v1418, %v1578
    %v1580 = vpop.f32.mrb[0].mxu0
    %1581 = vdwg.mxu0
    %v1678 = vunpack.c.l.b16 %v91
    %v1679 = vunpack.c.h.b16 %v91
    %v1680 = vunpack.c.l.b16 %v92
    %v1681 = vunpack.c.h.b16 %v92
    %v1682 = vunpack.c.l.b16 %v93
    %v1683 = vunpack.c.h.b16 %v93
    %v1684 = vunpack.c.l.b16 %v94
    %v1685 = vunpack.c.h.b16 %v94
    %v1686 = vunpack.c.l.b16 %v95
    %v1687 = vunpack.c.h.b16 %v95
    %v1688 = vunpack.c.l.b16 %v96
    %v1689 = vunpack.c.h.b16 %v96
    %v1690 = vunpack.c.l.b16 %v97
    %v1691 = vunpack.c.h.b16 %v97
    %v1692 = vunpack.c.l.b16 %v98
    %v1693 = vunpack.c.h.b16 %v98
    %v1694 = vunpack.c.l.b16 %v99
    %v1695 = vunpack.c.h.b16 %v99
    %v1696 = vunpack.c.l.b16 %v100
    %v1697 = vunpack.c.h.b16 %v100
    %v1698 = vunpack.c.l.b16 %v101
    %v1699 = vunpack.c.h.b16 %v101
    %v1700 = vunpack.c.l.b16 %v102
    %v1701 = vunpack.c.h.b16 %v102
    %v1702 = vunpack.c.l.b16 %v103
    %v1703 = vunpack.c.h.b16 %v103
    %v1704 = vunpack.c.l.b16 %v104
    %v1705 = vunpack.c.h.b16 %v104
    %v1706 = vunpack.c.l.b16 %v105
    %v1707 = vunpack.c.h.b16 %v105
    %v1708 = vunpack.c.l.b16 %v106
    %v1709 = vunpack.c.h.b16 %v106
    %v1710 = vunpack.c.l.b16 %v107
    %v1711 = vunpack.c.h.b16 %v107
    %v1712 = vunpack.c.l.b16 %v108
    %v1713 = vunpack.c.h.b16 %v108
    %v1714 = vunpack.c.l.b16 %v109
    %v1715 = vunpack.c.h.b16 %v109
    %v1716 = vunpack.c.l.b16 %v110
    %v1717 = vunpack.c.h.b16 %v110
    %v1718 = vunpack.c.l.b16 %v111
    %v1719 = vunpack.c.h.b16 %v111
    %v1720 = vunpack.c.l.b16 %v112
    %v1721 = vunpack.c.h.b16 %v112
    %v1722 = vunpack.c.l.b16 %v113
    %v1723 = vunpack.c.h.b16 %v113
    %v1724 = vunpack.c.l.b16 %v114
    %v1725 = vunpack.c.h.b16 %v114
    %v1726 = vunpack.c.l.b16 %v115
    %v1727 = vunpack.c.h.b16 %v115
    %v1728 = vunpack.c.l.b16 %v116
    %v1729 = vunpack.c.h.b16 %v116
    %v1730 = vunpack.c.l.b16 %v117
    %v1731 = vunpack.c.h.b16 %v117
    %v1732 = vunpack.c.l.b16 %v118
    %v1733 = vunpack.c.h.b16 %v118
    %v1734 = vunpack.c.l.b16 %v119
    %v1735 = vunpack.c.h.b16 %v119
    %v1736 = vunpack.c.l.b16 %v120
    %v1737 = vunpack.c.h.b16 %v120
    %v1738 = vunpack.c.l.b16 %v121
    %v1739 = vunpack.c.h.b16 %v121
    %v1740 = vunpack.c.l.b16 %v122
    %v1741 = vunpack.c.h.b16 %v122
    %v1742 = vunpack.c.l.b16 %v123
    %v1743 = vunpack.c.h.b16 %v123
    %v1744 = vunpack.c.l.b16 %v124
    %v1745 = vunpack.c.h.b16 %v124
    %v1746 = vunpack.c.l.b16 %v125
    %v1747 = vunpack.c.h.b16 %v125
    %v1748 = vunpack.c.l.b16 %v126
    %v1749 = vunpack.c.h.b16 %v126
    %v1750 = vunpack.c.l.b16 %v127
    %v1751 = vunpack.c.h.b16 %v127
    %v1752 = vunpack.c.l.b16 %v128
    %v1753 = vunpack.c.h.b16 %v128
    %v1754 = vunpack.c.l.b16 %v129
    %v1755 = vunpack.c.h.b16 %v129
    %v1756 = vunpack.c.l.b16 %v130
    %v1757 = vunpack.c.h.b16 %v130
    %v1758 = vunpack.c.l.b16 %v131
    %v1759 = vunpack.c.h.b16 %v131
    %v1760 = vunpack.c.l.b16 %v132
    %v1761 = vunpack.c.h.b16 %v132
    %v1762 = vunpack.c.l.b16 %v133
    %v1763 = vunpack.c.h.b16 %v133
    %v1764 = vunpack.c.l.b16 %v134
    %v1765 = vunpack.c.h.b16 %v134
    %v1766 = vunpack.c.l.b16 %v135
    %v1767 = vunpack.c.h.b16 %v135
    %v1768 = vunpack.c.l.b16 %v136
    %v1769 = vunpack.c.h.b16 %v136
    %v1770 = vunpack.c.l.b16 %v137
    %v1771 = vunpack.c.h.b16 %v137
    %v1772 = vunpack.c.l.b16 %v138
    %v1773 = vunpack.c.h.b16 %v138
    %v1774 = vunpack.c.l.b16 %v139
    %v1775 = vunpack.c.h.b16 %v139
    %v1776 = vunpack.c.l.b16 %v140
    %v1777 = vunpack.c.h.b16 %v140
    %v1778 = vunpack.c.l.b16 %v141
    %v1779 = vunpack.c.h.b16 %v141
    %v1780 = vunpack.c.l.b16 %v142
    %v1781 = vunpack.c.h.b16 %v142
    %v1782 = vunpack.c.l.b16 %v143
    %v1783 = vunpack.c.h.b16 %v143
    %v1784 = vunpack.c.l.b16 %v144
    %v1785 = vunpack.c.h.b16 %v144
    %v1786 = vunpack.c.l.b16 %v145
    %v1787 = vunpack.c.h.b16 %v145
    %v1788 = vunpack.c.l.b16 %v146
    %v1789 = vunpack.c.h.b16 %v146
    %v1790 = vunpack.c.l.b16 %v147
    %v1791 = vunpack.c.h.b16 %v147
    %v1792 = vunpack.c.l.b16 %v148
    %v1793 = vunpack.c.h.b16 %v148
    %v1794 = vunpack.c.l.b16 %v149
    %v1795 = vunpack.c.h.b16 %v149
    %v1796 = vunpack.c.l.b16 %v150
    %v1797 = vunpack.c.h.b16 %v150
    %v1798 = vunpack.c.l.b16 %v151
    %v1799 = vunpack.c.h.b16 %v151
    %v1800 = vunpack.c.l.b16 %v152
    %v1801 = vunpack.c.h.b16 %v152
    %v1802 = vunpack.c.l.b16 %v153
    %v1803 = vunpack.c.h.b16 %v153
    %v1804 = vunpack.c.l.b16 %v154
    %v1805 = vunpack.c.h.b16 %v154
    %v1806 = vunpack.c.l.b16 %v155
    %v1807 = vunpack.c.h.b16 %v155
    %v1808 = vunpack.c.l.b16 %v156
    %v1809 = vunpack.c.h.b16 %v156
    %v1810 = vunpack.c.l.b16 %v157
    %v1811 = vunpack.c.h.b16 %v157
    %v1812 = vunpack.c.l.b16 %v158
    %v1813 = vunpack.c.h.b16 %v158
    %v1814 = vunpack.c.l.b16 %v159
    %v1815 = vunpack.c.h.b16 %v159
    %v1816 = vunpack.c.l.b16 %v160
    %v1817 = vunpack.c.h.b16 %v160
    %v1818 = vunpack.c.l.b16 %v161
    %v1819 = vunpack.c.h.b16 %v161
    %v1820 = vunpack.c.l.b16 %v162
    %v1821 = vunpack.c.h.b16 %v162
    %v1822 = vunpack.c.l.b16 %v163
    %v1823 = vunpack.c.h.b16 %v163
    %v1824 = vunpack.c.l.b16 %v164
    %v1825 = vunpack.c.h.b16 %v164
    %v1826 = vunpack.c.l.b16 %v165
    %v1827 = vunpack.c.h.b16 %v165
    %v1828 = vunpack.c.l.b16 %v166
    %v1829 = vunpack.c.h.b16 %v166
    %v1830 = vunpack.c.l.b16 %v167
    %v1831 = vunpack.c.h.b16 %v167
    %v1832 = vunpack.c.l.b16 %v168
    %v1833 = vunpack.c.h.b16 %v168
    %v1834 = vunpack.c.l.b16 %v169
    %v1835 = vunpack.c.h.b16 %v169
    %v1836 = vunpack.c.l.b16 %v170
    %v1837 = vunpack.c.h.b16 %v170
    %v1838 = vunpack.c.l.b16 %v171
    %v1839 = vunpack.c.h.b16 %v171
    %v1840 = vunpack.c.l.b16 %v172
    %v1841 = vunpack.c.h.b16 %v172
    %v1842 = vunpack.c.l.b16 %v173
    %v1843 = vunpack.c.h.b16 %v173
    %v1844 = vunpack.c.l.b16 %v174
    %v1845 = vunpack.c.h.b16 %v174
    %v1846 = vunpack.c.l.b16 %v175
    %v1847 = vunpack.c.h.b16 %v175
    %v1848 = vunpack.c.l.b16 %v176
    %v1849 = vunpack.c.h.b16 %v176
    %v1850 = vunpack.c.l.b16 %v177
    %v1851 = vunpack.c.h.b16 %v177
    %v1852 = vunpack.c.l.b16 %v178
    %v1853 = vunpack.c.h.b16 %v178
    %v1854 = vunpack.c.l.b16 %v179
    %v1855 = vunpack.c.h.b16 %v179
    %v1856 = vunpack.c.l.b16 %v180
    %v1857 = vunpack.c.h.b16 %v180
    %v1858 = vunpack.c.l.b16 %v181
    %v1859 = vunpack.c.h.b16 %v181
    %v1860 = vunpack.c.l.b16 %v182
    %v1861 = vunpack.c.h.b16 %v182
    %v1862 = vunpack.c.l.b16 %v183
    %v1863 = vunpack.c.h.b16 %v183
    %v1864 = vunpack.c.l.b16 %v184
    %v1865 = vunpack.c.h.b16 %v184
    %v1866 = vunpack.c.l.b16 %v185
    %v1867 = vunpack.c.h.b16 %v185
    %v1868 = vunpack.c.l.b16 %v186
    %v1869 = vunpack.c.h.b16 %v186
    %v1870 = vpack.c.b16 %v1684, %v1678
    %v1871 = vpack.c.b16 %v1685, %v1679
    %v1872 = vpack.c.b16 %v1686, %v1680
    %v1873 = vpack.c.b16 %v1687, %v1681
    %v1874 = vpack.c.b16 %v1688, %v1682
    %v1875 = vpack.c.b16 %v1689, %v1683
    %v1876 = vpack.c.b16 %v1696, %v1690
    %v1877 = vpack.c.b16 %v1697, %v1691
    %v1878 = vpack.c.b16 %v1698, %v1692
    %v1879 = vpack.c.b16 %v1699, %v1693
    %v1880 = vpack.c.b16 %v1700, %v1694
    %v1881 = vpack.c.b16 %v1701, %v1695
    %v1882 = vpack.c.b16 %v1708, %v1702
    %v1883 = vpack.c.b16 %v1709, %v1703
    %v1884 = vpack.c.b16 %v1710, %v1704
    %v1885 = vpack.c.b16 %v1711, %v1705
    %v1886 = vpack.c.b16 %v1712, %v1706
    %v1887 = vpack.c.b16 %v1713, %v1707
    %v1888 = vpack.c.b16 %v1720, %v1714
    %v1889 = vpack.c.b16 %v1721, %v1715
    %v1890 = vpack.c.b16 %v1722, %v1716
    %v1891 = vpack.c.b16 %v1723, %v1717
    %v1892 = vpack.c.b16 %v1724, %v1718
    %v1893 = vpack.c.b16 %v1725, %v1719
    %v1894 = vpack.c.b16 %v1732, %v1726
    %v1895 = vpack.c.b16 %v1733, %v1727
    %v1896 = vpack.c.b16 %v1734, %v1728
    %v1897 = vpack.c.b16 %v1735, %v1729
    %v1898 = vpack.c.b16 %v1736, %v1730
    %v1899 = vpack.c.b16 %v1737, %v1731
    %v1900 = vpack.c.b16 %v1744, %v1738
    %v1901 = vpack.c.b16 %v1745, %v1739
    %v1902 = vpack.c.b16 %v1746, %v1740
    %v1903 = vpack.c.b16 %v1747, %v1741
    %v1904 = vpack.c.b16 %v1748, %v1742
    %v1905 = vpack.c.b16 %v1749, %v1743
    %v1906 = vpack.c.b16 %v1756, %v1750
    %v1907 = vpack.c.b16 %v1757, %v1751
    %v1908 = vpack.c.b16 %v1758, %v1752
    %v1909 = vpack.c.b16 %v1759, %v1753
    %v1910 = vpack.c.b16 %v1760, %v1754
    %v1911 = vpack.c.b16 %v1761, %v1755
    %v1912 = vpack.c.b16 %v1768, %v1762
    %v1913 = vpack.c.b16 %v1769, %v1763
    %v1914 = vpack.c.b16 %v1770, %v1764
    %v1915 = vpack.c.b16 %v1771, %v1765
    %v1916 = vpack.c.b16 %v1772, %v1766
    %v1917 = vpack.c.b16 %v1773, %v1767
    %v1918 = vpack.c.b16 %v1780, %v1774
    %v1919 = vpack.c.b16 %v1781, %v1775
    %v1920 = vpack.c.b16 %v1782, %v1776
    %v1921 = vpack.c.b16 %v1783, %v1777
    %v1922 = vpack.c.b16 %v1784, %v1778
    %v1923 = vpack.c.b16 %v1785, %v1779
    %v1924 = vpack.c.b16 %v1792, %v1786
    %v1925 = vpack.c.b16 %v1793, %v1787
    %v1926 = vpack.c.b16 %v1794, %v1788
    %v1927 = vpack.c.b16 %v1795, %v1789
    %v1928 = vpack.c.b16 %v1796, %v1790
    %v1929 = vpack.c.b16 %v1797, %v1791
    %v1930 = vpack.c.b16 %v1804, %v1798
    %v1931 = vpack.c.b16 %v1805, %v1799
    %v1932 = vpack.c.b16 %v1806, %v1800
    %v1933 = vpack.c.b16 %v1807, %v1801
    %v1934 = vpack.c.b16 %v1808, %v1802
    %v1935 = vpack.c.b16 %v1809, %v1803
    %v1936 = vpack.c.b16 %v1816, %v1810
    %v1937 = vpack.c.b16 %v1817, %v1811
    %v1938 = vpack.c.b16 %v1818, %v1812
    %v1939 = vpack.c.b16 %v1819, %v1813
    %v1940 = vpack.c.b16 %v1820, %v1814
    %v1941 = vpack.c.b16 %v1821, %v1815
    %v1942 = vpack.c.b16 %v1828, %v1822
    %v1943 = vpack.c.b16 %v1829, %v1823
    %v1944 = vpack.c.b16 %v1830, %v1824
    %v1945 = vpack.c.b16 %v1831, %v1825
    %v1946 = vpack.c.b16 %v1832, %v1826
    %v1947 = vpack.c.b16 %v1833, %v1827
    %v1948 = vpack.c.b16 %v1840, %v1834
    %v1949 = vpack.c.b16 %v1841, %v1835
    %v1950 = vpack.c.b16 %v1842, %v1836
    %v1951 = vpack.c.b16 %v1843, %v1837
    %v1952 = vpack.c.b16 %v1844, %v1838
    %v1953 = vpack.c.b16 %v1845, %v1839
    %v1954 = vpack.c.b16 %v1852, %v1846
    %v1955 = vpack.c.b16 %v1853, %v1847
    %v1956 = vpack.c.b16 %v1854, %v1848
    %v1957 = vpack.c.b16 %v1855, %v1849
    %v1958 = vpack.c.b16 %v1856, %v1850
    %v1959 = vpack.c.b16 %v1857, %v1851
    %v1960 = vpack.c.b16 %v1864, %v1858
    %v1961 = vpack.c.b16 %v1865, %v1859
    %v1962 = vpack.c.b16 %v1866, %v1860
    %v1963 = vpack.c.b16 %v1867, %v1861
    %v1964 = vpack.c.b16 %v1868, %v1862
    %v1965 = vpack.c.b16 %v1869, %v1863
    %v2110 = vunpack.c.l.b16 %v187
    %v2111 = vunpack.c.h.b16 %v187
    %v2112 = vunpack.c.l.b16 %v188
    %v2113 = vunpack.c.h.b16 %v188
    %v2114 = vunpack.c.l.b16 %v189
    %v2115 = vunpack.c.h.b16 %v189
    %v2116 = vunpack.c.l.b16 %v190
    %v2117 = vunpack.c.h.b16 %v190
    %v2118 = vunpack.c.l.b16 %v191
    %v2119 = vunpack.c.h.b16 %v191
    %v2120 = vunpack.c.l.b16 %v192
    %v2121 = vunpack.c.h.b16 %v192
    %v2122 = vunpack.c.l.b16 %v193
    %v2123 = vunpack.c.h.b16 %v193
    %v2124 = vunpack.c.l.b16 %v194
    %v2125 = vunpack.c.h.b16 %v194
    %v2126 = vunpack.c.l.b16 %v195
    %v2127 = vunpack.c.h.b16 %v195
    %v2128 = vunpack.c.l.b16 %v196
    %v2129 = vunpack.c.h.b16 %v196
    %v2130 = vunpack.c.l.b16 %v197
    %v2131 = vunpack.c.h.b16 %v197
    %v2132 = vunpack.c.l.b16 %v198
    %v2133 = vunpack.c.h.b16 %v198
    %v2134 = vunpack.c.l.b16 %v199
    %v2135 = vunpack.c.h.b16 %v199
    %v2136 = vunpack.c.l.b16 %v200
    %v2137 = vunpack.c.h.b16 %v200
    %v2138 = vunpack.c.l.b16 %v201
    %v2139 = vunpack.c.h.b16 %v201
    %v2140 = vunpack.c.l.b16 %v202
    %v2141 = vunpack.c.h.b16 %v202
    %v2142 = vunpack.c.l.b16 %v203
    %v2143 = vunpack.c.h.b16 %v203
    %v2144 = vunpack.c.l.b16 %v204
    %v2145 = vunpack.c.h.b16 %v204
    %v2146 = vunpack.c.l.b16 %v205
    %v2147 = vunpack.c.h.b16 %v205
    %v2148 = vunpack.c.l.b16 %v206
    %v2149 = vunpack.c.h.b16 %v206
    %v2150 = vunpack.c.l.b16 %v207
    %v2151 = vunpack.c.h.b16 %v207
    %v2152 = vunpack.c.l.b16 %v208
    %v2153 = vunpack.c.h.b16 %v208
    %v2154 = vunpack.c.l.b16 %v209
    %v2155 = vunpack.c.h.b16 %v209
    %v2156 = vunpack.c.l.b16 %v210
    %v2157 = vunpack.c.h.b16 %v210
    %v2158 = vunpack.c.l.b16 %v211
    %v2159 = vunpack.c.h.b16 %v211
    %v2160 = vunpack.c.l.b16 %v212
    %v2161 = vunpack.c.h.b16 %v212
    %v2162 = vunpack.c.l.b16 %v213
    %v2163 = vunpack.c.h.b16 %v213
    %v2164 = vunpack.c.l.b16 %v214
    %v2165 = vunpack.c.h.b16 %v214
    %v2166 = vunpack.c.l.b16 %v215
    %v2167 = vunpack.c.h.b16 %v215
    %v2168 = vunpack.c.l.b16 %v216
    %v2169 = vunpack.c.h.b16 %v216
    %v2170 = vunpack.c.l.b16 %v217
    %v2171 = vunpack.c.h.b16 %v217
    %v2172 = vunpack.c.l.b16 %v218
    %v2173 = vunpack.c.h.b16 %v218
    %v2174 = vunpack.c.l.b16 %v219
    %v2175 = vunpack.c.h.b16 %v219
    %v2176 = vunpack.c.l.b16 %v220
    %v2177 = vunpack.c.h.b16 %v220
    %v2178 = vunpack.c.l.b16 %v221
    %v2179 = vunpack.c.h.b16 %v221
    %v2180 = vunpack.c.l.b16 %v222
    %v2181 = vunpack.c.h.b16 %v222
    %v2182 = vunpack.c.l.b16 %v223
    %v2183 = vunpack.c.h.b16 %v223
    %v2184 = vunpack.c.l.b16 %v224
    %v2185 = vunpack.c.h.b16 %v224
    %v2186 = vunpack.c.l.b16 %v225
    %v2187 = vunpack.c.h.b16 %v225
    %v2188 = vunpack.c.l.b16 %v226
    %v2189 = vunpack.c.h.b16 %v226
    %v2190 = vunpack.c.l.b16 %v227
    %v2191 = vunpack.c.h.b16 %v227
    %v2192 = vunpack.c.l.b16 %v228
    %v2193 = vunpack.c.h.b16 %v228
    %v2194 = vunpack.c.l.b16 %v229
    %v2195 = vunpack.c.h.b16 %v229
    %v2196 = vunpack.c.l.b16 %v230
    %v2197 = vunpack.c.h.b16 %v230
    %v2198 = vunpack.c.l.b16 %v231
    %v2199 = vunpack.c.h.b16 %v231
    %v2200 = vunpack.c.l.b16 %v232
    %v2201 = vunpack.c.h.b16 %v232
    %v2202 = vunpack.c.l.b16 %v233
    %v2203 = vunpack.c.h.b16 %v233
    %v2204 = vunpack.c.l.b16 %v234
    %v2205 = vunpack.c.h.b16 %v234
    %v2206 = vpack.c.b16 %v2116, %v2110
    %v2207 = vpack.c.b16 %v2117, %v2111
    %v2208 = vpack.c.b16 %v2118, %v2112
    %v2209 = vpack.c.b16 %v2119, %v2113
    %v2210 = vpack.c.b16 %v2120, %v2114
    %v2211 = vpack.c.b16 %v2121, %v2115
    %v2212 = vpack.c.b16 %v2128, %v2122
    %v2213 = vpack.c.b16 %v2129, %v2123
    %v2214 = vpack.c.b16 %v2130, %v2124
    %v2215 = vpack.c.b16 %v2131, %v2125
    %v2216 = vpack.c.b16 %v2132, %v2126
    %v2217 = vpack.c.b16 %v2133, %v2127
    %v2218 = vpack.c.b16 %v2140, %v2134
    %v2219 = vpack.c.b16 %v2141, %v2135
    %v2220 = vpack.c.b16 %v2142, %v2136
    %v2221 = vpack.c.b16 %v2143, %v2137
    %v2222 = vpack.c.b16 %v2144, %v2138
    %v2223 = vpack.c.b16 %v2145, %v2139
    %v2224 = vpack.c.b16 %v2152, %v2146
    %v2225 = vpack.c.b16 %v2153, %v2147
    %v2226 = vpack.c.b16 %v2154, %v2148
    %v2227 = vpack.c.b16 %v2155, %v2149
    %v2228 = vpack.c.b16 %v2156, %v2150
    %v2229 = vpack.c.b16 %v2157, %v2151
    %v2230 = vpack.c.b16 %v2164, %v2158
    %v2231 = vpack.c.b16 %v2165, %v2159
    %v2232 = vpack.c.b16 %v2166, %v2160
    %v2233 = vpack.c.b16 %v2167, %v2161
    %v2234 = vpack.c.b16 %v2168, %v2162
    %v2235 = vpack.c.b16 %v2169, %v2163
    %v2236 = vpack.c.b16 %v2176, %v2170
    %v2237 = vpack.c.b16 %v2177, %v2171
    %v2238 = vpack.c.b16 %v2178, %v2172
    %v2239 = vpack.c.b16 %v2179, %v2173
    %v2240 = vpack.c.b16 %v2180, %v2174
    %v2241 = vpack.c.b16 %v2181, %v2175
    %v2242 = vpack.c.b16 %v2188, %v2182
    %v2243 = vpack.c.b16 %v2189, %v2183
    %v2244 = vpack.c.b16 %v2190, %v2184
    %v2245 = vpack.c.b16 %v2191, %v2185
    %v2246 = vpack.c.b16 %v2192, %v2186
    %v2247 = vpack.c.b16 %v2193, %v2187
    %v2248 = vpack.c.b16 %v2200, %v2194
    %v2249 = vpack.c.b16 %v2201, %v2195
    %v2250 = vpack.c.b16 %v2202, %v2196
    %v2251 = vpack.c.b16 %v2203, %v2197
    %v2252 = vpack.c.b16 %v2204, %v2198
    %v2253 = vpack.c.b16 %v2205, %v2199
    %2302 = vmatprep.subr.bf16.mxu0 %v2207
    %2303 = vmatpush1.bf16.xpose.msra.mxu0 %v2206
    %2304 = vmatprep.subr.bf16.mxu0 %v2213
    %2305 = vmatpush1.bf16.xpose.msra.mxu0 %v2212
    %2306 = vmatprep.subr.bf16.mxu0 %v2219
    %2307 = vmatpush1.bf16.xpose.msra.mxu0 %v2218
    %2308 = vmatprep.subr.bf16.mxu0 %v2225
    %2309 = vmatpush1.bf16.xpose.msra.mxu0 %v2224
    %2310 = vmatprep.subr.bf16.mxu0 %v2231
    %2311 = vmatpush1.bf16.xpose.msra.mxu0 %v2230
    %2312 = vmatprep.subr.bf16.mxu0 %v2237
    %2313 = vmatpush1.bf16.xpose.msra.mxu0 %v2236
    %2314 = vmatprep.subr.bf16.mxu0 %v2243
    %2315 = vmatpush1.bf16.xpose.msra.mxu0 %v2242
    %2316 = vmatprep.subr.bf16.mxu0 %v2249
    %2317 = vmatpush1.bf16.xpose.msra.mxu0 %v2248
    %2318 = vmatprep.subr.bf16.mxu0 0
    %2319 = vmatpush1.bf16.xpose.msra.mxu0 0
    %2320 = vmatprep.subr.bf16.mxu0 0
    %2321 = vmatpush1.bf16.xpose.msra.mxu0 0
    %2322 = vmatprep.subr.bf16.mxu0 0
    %2323 = vmatpush1.bf16.xpose.msra.mxu0 0
    %2324 = vmatprep.subr.bf16.mxu0 0
    %2325 = vmatpush1.bf16.xpose.msra.mxu0 0
    %2326 = vmatprep.subr.bf16.mxu0 0
    %2327 = vmatpush1.bf16.xpose.msra.mxu0 0
    %2328 = vmatprep.subr.bf16.mxu0 0
    %2329 = vmatpush1.bf16.xpose.msra.mxu0 0
    %2330 = vmatprep.subr.bf16.mxu0 0
    %2331 = vmatpush1.bf16.xpose.msra.mxu0 0
    %2332 = vmatprep.subr.bf16.mxu0 0
    %2333 = vmatpush1.bf16.xpose.msra.mxu0 0
    %2334 = vmatprep.mubr.bf16.mxu0 %v1871
    %2335 = vmatmul.mubr.bf16.gmra.mrb[0].mxu0 %v1870
    %v2336 = vpop.f32.mrb[0].mxu0
    %v2337 = vadd.f32 %v1456, %v2336
    %v2338 = vpop.f32.mrb[0].mxu0
    %v2339 = vpop.f32.mrb[0].mxu0
    %v2340 = vadd.f32 %v1459, %v2339
    %v2341 = vpop.f32.mrb[0].mxu0
    %2342 = vmatprep.mubr.bf16.mxu0 %v1877
    %2343 = vmatmul.mubr.bf16.gmra.mrb[0].mxu0 %v1876
    %v2344 = vpop.f32.mrb[0].mxu0
    %v2345 = vadd.f32 %v1464, %v2344
    %v2346 = vpop.f32.mrb[0].mxu0
    %v2347 = vpop.f32.mrb[0].mxu0
    %v2348 = vadd.f32 %v1467, %v2347
    %v2349 = vpop.f32.mrb[0].mxu0
    %2350 = vmatprep.mubr.bf16.mxu0 %v1883
    %2351 = vmatmul.mubr.bf16.gmra.mrb[0].mxu0 %v1882
    %v2352 = vpop.f32.mrb[0].mxu0
    %v2353 = vadd.f32 %v1472, %v2352
    %v2354 = vpop.f32.mrb[0].mxu0
    %v2355 = vpop.f32.mrb[0].mxu0
    %v2356 = vadd.f32 %v1475, %v2355
    %v2357 = vpop.f32.mrb[0].mxu0
    %2358 = vmatprep.mubr.bf16.mxu0 %v1889
    %2359 = vmatmul.mubr.bf16.gmra.mrb[0].mxu0 %v1888
    %v2360 = vpop.f32.mrb[0].mxu0
    %v2361 = vadd.f32 %v1480, %v2360
    %v2362 = vpop.f32.mrb[0].mxu0
    %v2363 = vpop.f32.mrb[0].mxu0
    %v2364 = vadd.f32 %v1483, %v2363
    %v2365 = vpop.f32.mrb[0].mxu0
    %2366 = vmatprep.mubr.bf16.mxu0 %v1895
    %2367 = vmatmul.mubr.bf16.gmra.mrb[0].mxu0 %v1894
    %v2368 = vpop.f32.mrb[0].mxu0
    %v2369 = vadd.f32 %v1488, %v2368
    %v2370 = vpop.f32.mrb[0].mxu0
    %v2371 = vpop.f32.mrb[0].mxu0
    %v2372 = vadd.f32 %v1491, %v2371
    %v2373 = vpop.f32.mrb[0].mxu0
    %2374 = vmatprep.mubr.bf16.mxu0 %v1901
    %2375 = vmatmul.mubr.bf16.gmra.mrb[0].mxu0 %v1900
    %v2376 = vpop.f32.mrb[0].mxu0
    %v2377 = vadd.f32 %v1496, %v2376
    %v2378 = vpop.f32.mrb[0].mxu0
    %v2379 = vpop.f32.mrb[0].mxu0
    %v2380 = vadd.f32 %v1499, %v2379
    %v2381 = vpop.f32.mrb[0].mxu0
    %2382 = vmatprep.mubr.bf16.mxu0 %v1907
    %2383 = vmatmul.mubr.bf16.gmra.mrb[0].mxu0 %v1906
    %v2384 = vpop.f32.mrb[0].mxu0
    %v2385 = vadd.f32 %v1504, %v2384
    %v2386 = vpop.f32.mrb[0].mxu0
    %v2387 = vpop.f32.mrb[0].mxu0
    %v2388 = vadd.f32 %v1507, %v2387
    %v2389 = vpop.f32.mrb[0].mxu0
    %2390 = vmatprep.mubr.bf16.mxu0 %v1913
    %2391 = vmatmul.mubr.bf16.gmra.mrb[0].mxu0 %v1912
    %v2392 = vpop.f32.mrb[0].mxu0
    %v2393 = vadd.f32 %v1512, %v2392
    %v2394 = vpop.f32.mrb[0].mxu0
    %v2395 = vpop.f32.mrb[0].mxu0
    %v2396 = vadd.f32 %v1515, %v2395
    %v2397 = vpop.f32.mrb[0].mxu0
    %2398 = vmatprep.mubr.bf16.mxu0 %v1919
    %2399 = vmatmul.mubr.bf16.gmra.mrb[0].mxu0 %v1918
    %v2400 = vpop.f32.mrb[0].mxu0
    %v2401 = vadd.f32 %v1520, %v2400
    %v2402 = vpop.f32.mrb[0].mxu0
    %v2403 = vpop.f32.mrb[0].mxu0
    %v2404 = vadd.f32 %v1523, %v2403
    %v2405 = vpop.f32.mrb[0].mxu0
    %2406 = vmatprep.mubr.bf16.mxu0 %v1925
    %2407 = vmatmul.mubr.bf16.gmra.mrb[0].mxu0 %v1924
    %v2408 = vpop.f32.mrb[0].mxu0
    %v2409 = vadd.f32 %v1528, %v2408
    %v2410 = vpop.f32.mrb[0].mxu0
    %v2411 = vpop.f32.mrb[0].mxu0
    %v2412 = vadd.f32 %v1531, %v2411
    %v2413 = vpop.f32.mrb[0].mxu0
    %2414 = vmatprep.mubr.bf16.mxu0 %v1931
    %2415 = vmatmul.mubr.bf16.gmra.mrb[0].mxu0 %v1930
    %v2416 = vpop.f32.mrb[0].mxu0
    %v2417 = vadd.f32 %v1536, %v2416
    %v2418 = vpop.f32.mrb[0].mxu0
    %v2419 = vpop.f32.mrb[0].mxu0
    %v2420 = vadd.f32 %v1539, %v2419
    %v2421 = vpop.f32.mrb[0].mxu0
    %2422 = vmatprep.mubr.bf16.mxu0 %v1937
    %2423 = vmatmul.mubr.bf16.gmra.mrb[0].mxu0 %v1936
    %v2424 = vpop.f32.mrb[0].mxu0
    %v2425 = vadd.f32 %v1544, %v2424
    %v2426 = vpop.f32.mrb[0].mxu0
    %v2427 = vpop.f32.mrb[0].mxu0
    %v2428 = vadd.f32 %v1547, %v2427
    %v2429 = vpop.f32.mrb[0].mxu0
    %2430 = vmatprep.mubr.bf16.mxu0 %v1943
    %2431 = vmatmul.mubr.bf16.gmra.mrb[0].mxu0 %v1942
    %v2432 = vpop.f32.mrb[0].mxu0
    %v2433 = vadd.f32 %v1552, %v2432
    %v2434 = vpop.f32.mrb[0].mxu0
    %v2435 = vpop.f32.mrb[0].mxu0
    %v2436 = vadd.f32 %v1555, %v2435
    %v2437 = vpop.f32.mrb[0].mxu0
    %2438 = vmatprep.mubr.bf16.mxu0 %v1949
    %2439 = vmatmul.mubr.bf16.gmra.mrb[0].mxu0 %v1948
    %v2440 = vpop.f32.mrb[0].mxu0
    %v2441 = vadd.f32 %v1560, %v2440
    %v2442 = vpop.f32.mrb[0].mxu0
    %v2443 = vpop.f32.mrb[0].mxu0
    %v2444 = vadd.f32 %v1563, %v2443
    %v2445 = vpop.f32.mrb[0].mxu0
    %2446 = vmatprep.mubr.bf16.mxu0 %v1955
    %2447 = vmatmul.mubr.bf16.gmra.mrb[0].mxu0 %v1954
    %v2448 = vpop.f32.mrb[0].mxu0
    %v2449 = vadd.f32 %v1568, %v2448
    %v2450 = vpop.f32.mrb[0].mxu0
    %v2451 = vpop.f32.mrb[0].mxu0
    %v2452 = vadd.f32 %v1571, %v2451
    %v2453 = vpop.f32.mrb[0].mxu0
    %2454 = vmatprep.mubr.bf16.mxu0 %v1961
    %2455 = vmatmul.mubr.bf16.gmra.mrb[0].mxu0 %v1960
    %v2456 = vpop.f32.mrb[0].mxu0
    %v2457 = vadd.f32 %v1576, %v2456
    %v2458 = vpop.f32.mrb[0].mxu0
    %v2459 = vpop.f32.mrb[0].mxu0
    %v2460 = vadd.f32 %v1579, %v2459
    %v2461 = vpop.f32.mrb[0].mxu0
    %2462 = vdwg.mxu0
    %2463 = vmatprep.subr.bf16.mxu0 %v2209
    %2464 = vmatpush1.bf16.xpose.msra.mxu0 %v2208
    %2465 = vmatprep.subr.bf16.mxu0 %v2215
    %2466 = vmatpush1.bf16.xpose.msra.mxu0 %v2214
    %2467 = vmatprep.subr.bf16.mxu0 %v2221
    %2468 = vmatpush1.bf16.xpose.msra.mxu0 %v2220
    %2469 = vmatprep.subr.bf16.mxu0 %v2227
    %2470 = vmatpush1.bf16.xpose.msra.mxu0 %v2226
    %2471 = vmatprep.subr.bf16.mxu0 %v2233
    %2472 = vmatpush1.bf16.xpose.msra.mxu0 %v2232
    %2473 = vmatprep.subr.bf16.mxu0 %v2239
    %2474 = vmatpush1.bf16.xpose.msra.mxu0 %v2238
    %2475 = vmatprep.subr.bf16.mxu0 %v2245
    %2476 = vmatpush1.bf16.xpose.msra.mxu0 %v2244
    %2477 = vmatprep.subr.bf16.mxu0 %v2251
    %2478 = vmatpush1.bf16.xpose.msra.mxu0 %v2250
    %2479 = vmatprep.subr.bf16.mxu0 0
    %2480 = vmatpush1.bf16.xpose.msra.mxu0 0
    %2481 = vmatprep.subr.bf16.mxu0 0
    %2482 = vmatpush1.bf16.xpose.msra.mxu0 0
    %2483 = vmatprep.subr.bf16.mxu0 0
    %2484 = vmatpush1.bf16.xpose.msra.mxu0 0
    %2485 = vmatprep.subr.bf16.mxu0 0
    %2486 = vmatpush1.bf16.xpose.msra.mxu0 0
    %2487 = vmatprep.subr.bf16.mxu0 0
    %2488 = vmatpush1.bf16.xpose.msra.mxu0 0
    %2489 = vmatprep.subr.bf16.mxu0 0
    %2490 = vmatpush1.bf16.xpose.msra.mxu0 0
    %2491 = vmatprep.subr.bf16.mxu0 0
    %2492 = vmatpush1.bf16.xpose.msra.mxu0 0
    %2493 = vmatprep.subr.bf16.mxu0 0
    %2494 = vmatpush1.bf16.xpose.msra.mxu0 0
    %2495 = vmatprep.mubr.bf16.mxu0 %v1873
    %2496 = vmatmul.mubr.bf16.gmra.mrb[0].mxu0 %v1872
    %v2497 = vpop.f32.mrb[0].mxu0
    %v2498 = vadd.f32 %v2337, %v2497
    %v2499 = vpop.f32.mrb[0].mxu0
    %v2500 = vpop.f32.mrb[0].mxu0
    %v2501 = vadd.f32 %v2340, %v2500
    %v2502 = vpop.f32.mrb[0].mxu0
    %2503 = vmatprep.mubr.bf16.mxu0 %v1879
    %2504 = vmatmul.mubr.bf16.gmra.mrb[0].mxu0 %v1878
    %v2505 = vpop.f32.mrb[0].mxu0
    %v2506 = vadd.f32 %v2345, %v2505
    %v2507 = vpop.f32.mrb[0].mxu0
    %v2508 = vpop.f32.mrb[0].mxu0
    %v2509 = vadd.f32 %v2348, %v2508
    %v2510 = vpop.f32.mrb[0].mxu0
    %2511 = vmatprep.mubr.bf16.mxu0 %v1885
    %2512 = vmatmul.mubr.bf16.gmra.mrb[0].mxu0 %v1884
    %v2513 = vpop.f32.mrb[0].mxu0
    %v2514 = vadd.f32 %v2353, %v2513
    %v2515 = vpop.f32.mrb[0].mxu0
    %v2516 = vpop.f32.mrb[0].mxu0
    %v2517 = vadd.f32 %v2356, %v2516
    %v2518 = vpop.f32.mrb[0].mxu0
    %2519 = vmatprep.mubr.bf16.mxu0 %v1891
    %2520 = vmatmul.mubr.bf16.gmra.mrb[0].mxu0 %v1890
    %v2521 = vpop.f32.mrb[0].mxu0
    %v2522 = vadd.f32 %v2361, %v2521
    %v2523 = vpop.f32.mrb[0].mxu0
    %v2524 = vpop.f32.mrb[0].mxu0
    %v2525 = vadd.f32 %v2364, %v2524
    %v2526 = vpop.f32.mrb[0].mxu0
    %2527 = vmatprep.mubr.bf16.mxu0 %v1897
    %2528 = vmatmul.mubr.bf16.gmra.mrb[0].mxu0 %v1896
    %v2529 = vpop.f32.mrb[0].mxu0
    %v2530 = vadd.f32 %v2369, %v2529
    %v2531 = vpop.f32.mrb[0].mxu0
    %v2532 = vpop.f32.mrb[0].mxu0
    %v2533 = vadd.f32 %v2372, %v2532
    %v2534 = vpop.f32.mrb[0].mxu0
    %2535 = vmatprep.mubr.bf16.mxu0 %v1903
    %2536 = vmatmul.mubr.bf16.gmra.mrb[0].mxu0 %v1902
    %v2537 = vpop.f32.mrb[0].mxu0
    %v2538 = vadd.f32 %v2377, %v2537
    %v2539 = vpop.f32.mrb[0].mxu0
    %v2540 = vpop.f32.mrb[0].mxu0
    %v2541 = vadd.f32 %v2380, %v2540
    %v2542 = vpop.f32.mrb[0].mxu0
    %2543 = vmatprep.mubr.bf16.mxu0 %v1909
    %2544 = vmatmul.mubr.bf16.gmra.mrb[0].mxu0 %v1908
    %v2545 = vpop.f32.mrb[0].mxu0
    %v2546 = vadd.f32 %v2385, %v2545
    %v2547 = vpop.f32.mrb[0].mxu0
    %v2548 = vpop.f32.mrb[0].mxu0
    %v2549 = vadd.f32 %v2388, %v2548
    %v2550 = vpop.f32.mrb[0].mxu0
    %2551 = vmatprep.mubr.bf16.mxu0 %v1915
    %2552 = vmatmul.mubr.bf16.gmra.mrb[0].mxu0 %v1914
    %v2553 = vpop.f32.mrb[0].mxu0
    %v2554 = vadd.f32 %v2393, %v2553
    %v2555 = vpop.f32.mrb[0].mxu0
    %v2556 = vpop.f32.mrb[0].mxu0
    %v2557 = vadd.f32 %v2396, %v2556
    %v2558 = vpop.f32.mrb[0].mxu0
    %2559 = vmatprep.mubr.bf16.mxu0 %v1921
    %2560 = vmatmul.mubr.bf16.gmra.mrb[0].mxu0 %v1920
    %v2561 = vpop.f32.mrb[0].mxu0
    %v2562 = vadd.f32 %v2401, %v2561
    %v2563 = vpop.f32.mrb[0].mxu0
    %v2564 = vpop.f32.mrb[0].mxu0
    %v2565 = vadd.f32 %v2404, %v2564
    %v2566 = vpop.f32.mrb[0].mxu0
    %2567 = vmatprep.mubr.bf16.mxu0 %v1927
    %2568 = vmatmul.mubr.bf16.gmra.mrb[0].mxu0 %v1926
    %v2569 = vpop.f32.mrb[0].mxu0
    %v2570 = vadd.f32 %v2409, %v2569
    %v2571 = vpop.f32.mrb[0].mxu0
    %v2572 = vpop.f32.mrb[0].mxu0
    %v2573 = vadd.f32 %v2412, %v2572
    %v2574 = vpop.f32.mrb[0].mxu0
    %2575 = vmatprep.mubr.bf16.mxu0 %v1933
    %2576 = vmatmul.mubr.bf16.gmra.mrb[0].mxu0 %v1932
    %v2577 = vpop.f32.mrb[0].mxu0
    %v2578 = vadd.f32 %v2417, %v2577
    %v2579 = vpop.f32.mrb[0].mxu0
    %v2580 = vpop.f32.mrb[0].mxu0
    %v2581 = vadd.f32 %v2420, %v2580
    %v2582 = vpop.f32.mrb[0].mxu0
    %2583 = vmatprep.mubr.bf16.mxu0 %v1939
    %2584 = vmatmul.mubr.bf16.gmra.mrb[0].mxu0 %v1938
    %v2585 = vpop.f32.mrb[0].mxu0
    %v2586 = vadd.f32 %v2425, %v2585
    %v2587 = vpop.f32.mrb[0].mxu0
    %v2588 = vpop.f32.mrb[0].mxu0
    %v2589 = vadd.f32 %v2428, %v2588
    %v2590 = vpop.f32.mrb[0].mxu0
    %2591 = vmatprep.mubr.bf16.mxu0 %v1945
    %2592 = vmatmul.mubr.bf16.gmra.mrb[0].mxu0 %v1944
    %v2593 = vpop.f32.mrb[0].mxu0
    %v2594 = vadd.f32 %v2433, %v2593
    %v2595 = vpop.f32.mrb[0].mxu0
    %v2596 = vpop.f32.mrb[0].mxu0
    %v2597 = vadd.f32 %v2436, %v2596
    %v2598 = vpop.f32.mrb[0].mxu0
    %2599 = vmatprep.mubr.bf16.mxu0 %v1951
    %2600 = vmatmul.mubr.bf16.gmra.mrb[0].mxu0 %v1950
    %v2601 = vpop.f32.mrb[0].mxu0
    %v2602 = vadd.f32 %v2441, %v2601
    %v2603 = vpop.f32.mrb[0].mxu0
    %v2604 = vpop.f32.mrb[0].mxu0
    %v2605 = vadd.f32 %v2444, %v2604
    %v2606 = vpop.f32.mrb[0].mxu0
    %2607 = vmatprep.mubr.bf16.mxu0 %v1957
    %2608 = vmatmul.mubr.bf16.gmra.mrb[0].mxu0 %v1956
    %v2609 = vpop.f32.mrb[0].mxu0
    %v2610 = vadd.f32 %v2449, %v2609
    %v2611 = vpop.f32.mrb[0].mxu0
    %v2612 = vpop.f32.mrb[0].mxu0
    %v2613 = vadd.f32 %v2452, %v2612
    %v2614 = vpop.f32.mrb[0].mxu0
    %2615 = vmatprep.mubr.bf16.mxu0 %v1963
    %2616 = vmatmul.mubr.bf16.gmra.mrb[0].mxu0 %v1962
    %v2617 = vpop.f32.mrb[0].mxu0
    %v2618 = vadd.f32 %v2457, %v2617
    %v2619 = vpop.f32.mrb[0].mxu0
    %v2620 = vpop.f32.mrb[0].mxu0
    %v2621 = vadd.f32 %v2460, %v2620
    %v2622 = vpop.f32.mrb[0].mxu0
    %2623 = vdwg.mxu0
    %2624 = vmatprep.subr.bf16.mxu0 %v2211
    %2625 = vmatpush1.bf16.xpose.msra.mxu0 %v2210
    %2626 = vmatprep.subr.bf16.mxu0 %v2217
    %2627 = vmatpush1.bf16.xpose.msra.mxu0 %v2216
    %2628 = vmatprep.subr.bf16.mxu0 %v2223
    %2629 = vmatpush1.bf16.xpose.msra.mxu0 %v2222
    %2630 = vmatprep.subr.bf16.mxu0 %v2229
    %2631 = vmatpush1.bf16.xpose.msra.mxu0 %v2228
    %2632 = vmatprep.subr.bf16.mxu0 %v2235
    %2633 = vmatpush1.bf16.xpose.msra.mxu0 %v2234
    %2634 = vmatprep.subr.bf16.mxu0 %v2241
    %2635 = vmatpush1.bf16.xpose.msra.mxu0 %v2240
    %2636 = vmatprep.subr.bf16.mxu0 %v2247
    %2637 = vmatpush1.bf16.xpose.msra.mxu0 %v2246
    %2638 = vmatprep.subr.bf16.mxu0 %v2253
    %2639 = vmatpush1.bf16.xpose.msra.mxu0 %v2252
    %2640 = vmatprep.subr.bf16.mxu0 0
    %2641 = vmatpush1.bf16.xpose.msra.mxu0 0
    %2642 = vmatprep.subr.bf16.mxu0 0
    %2643 = vmatpush1.bf16.xpose.msra.mxu0 0
    %2644 = vmatprep.subr.bf16.mxu0 0
    %2645 = vmatpush1.bf16.xpose.msra.mxu0 0
    %2646 = vmatprep.subr.bf16.mxu0 0
    %2647 = vmatpush1.bf16.xpose.msra.mxu0 0
    %2648 = vmatprep.subr.bf16.mxu0 0
    %2649 = vmatpush1.bf16.xpose.msra.mxu0 0
    %2650 = vmatprep.subr.bf16.mxu0 0
    %2651 = vmatpush1.bf16.xpose.msra.mxu0 0
    %2652 = vmatprep.subr.bf16.mxu0 0
    %2653 = vmatpush1.bf16.xpose.msra.mxu0 0
    %2654 = vmatprep.subr.bf16.mxu0 0
    %2655 = vmatpush1.bf16.xpose.msra.mxu0 0
    %2656 = vmatprep.mubr.bf16.mxu0 %v1875
    %2657 = vmatmul.mubr.bf16.gmra.mrb[0].mxu0 %v1874
    %v2658 = vpop.f32.mrb[0].mxu0
    %v2659 = vadd.f32 %v2498, %v2658
    %v2660 = vpop.f32.mrb[0].mxu0
    %v2661 = vpop.f32.mrb[0].mxu0
    %v2662 = vadd.f32 %v2501, %v2661
    %v2663 = vpop.f32.mrb[0].mxu0
    %2664 = vmatprep.mubr.bf16.mxu0 %v1881
    %2665 = vmatmul.mubr.bf16.gmra.mrb[0].mxu0 %v1880
    %v2666 = vpop.f32.mrb[0].mxu0
    %v2667 = vadd.f32 %v2506, %v2666
    %v2668 = vpop.f32.mrb[0].mxu0
    %v2669 = vpop.f32.mrb[0].mxu0
    %v2670 = vadd.f32 %v2509, %v2669
    %v2671 = vpop.f32.mrb[0].mxu0
    %2672 = vmatprep.mubr.bf16.mxu0 %v1887
    %2673 = vmatmul.mubr.bf16.gmra.mrb[0].mxu0 %v1886
    %v2674 = vpop.f32.mrb[0].mxu0
    %v2675 = vadd.f32 %v2514, %v2674
    %v2676 = vpop.f32.mrb[0].mxu0
    %v2677 = vpop.f32.mrb[0].mxu0
    %v2678 = vadd.f32 %v2517, %v2677
    %v2679 = vpop.f32.mrb[0].mxu0
    %2680 = vmatprep.mubr.bf16.mxu0 %v1893
    %2681 = vmatmul.mubr.bf16.gmra.mrb[0].mxu0 %v1892
    %v2682 = vpop.f32.mrb[0].mxu0
    %v2683 = vadd.f32 %v2522, %v2682
    %v2684 = vpop.f32.mrb[0].mxu0
    %v2685 = vpop.f32.mrb[0].mxu0
    %v2686 = vadd.f32 %v2525, %v2685
    %v2687 = vpop.f32.mrb[0].mxu0
    %2688 = vmatprep.mubr.bf16.mxu0 %v1899
    %2689 = vmatmul.mubr.bf16.gmra.mrb[0].mxu0 %v1898
    %v2690 = vpop.f32.mrb[0].mxu0
    %v2691 = vadd.f32 %v2530, %v2690
    %v2692 = vpop.f32.mrb[0].mxu0
    %v2693 = vpop.f32.mrb[0].mxu0
    %v2694 = vadd.f32 %v2533, %v2693
    %v2695 = vpop.f32.mrb[0].mxu0
    %2696 = vmatprep.mubr.bf16.mxu0 %v1905
    %2697 = vmatmul.mubr.bf16.gmra.mrb[0].mxu0 %v1904
    %v2698 = vpop.f32.mrb[0].mxu0
    %v2699 = vadd.f32 %v2538, %v2698
    %v2700 = vpop.f32.mrb[0].mxu0
    %v2701 = vpop.f32.mrb[0].mxu0
    %v2702 = vadd.f32 %v2541, %v2701
    %v2703 = vpop.f32.mrb[0].mxu0
    %2704 = vmatprep.mubr.bf16.mxu0 %v1911
    %2705 = vmatmul.mubr.bf16.gmra.mrb[0].mxu0 %v1910
    %v2706 = vpop.f32.mrb[0].mxu0
    %v2707 = vadd.f32 %v2546, %v2706
    %v2708 = vpop.f32.mrb[0].mxu0
    %v2709 = vpop.f32.mrb[0].mxu0
    %v2710 = vadd.f32 %v2549, %v2709
    %v2711 = vpop.f32.mrb[0].mxu0
    %2712 = vmatprep.mubr.bf16.mxu0 %v1917
    %2713 = vmatmul.mubr.bf16.gmra.mrb[0].mxu0 %v1916
    %v2714 = vpop.f32.mrb[0].mxu0
    %v2715 = vadd.f32 %v2554, %v2714
    %v2716 = vpop.f32.mrb[0].mxu0
    %v2717 = vpop.f32.mrb[0].mxu0
    %v2718 = vadd.f32 %v2557, %v2717
    %v2719 = vpop.f32.mrb[0].mxu0
    %2720 = vmatprep.mubr.bf16.mxu0 %v1923
    %2721 = vmatmul.mubr.bf16.gmra.mrb[0].mxu0 %v1922
    %v2722 = vpop.f32.mrb[0].mxu0
    %v2723 = vadd.f32 %v2562, %v2722
    %v2724 = vpop.f32.mrb[0].mxu0
    %v2725 = vpop.f32.mrb[0].mxu0
    %v2726 = vadd.f32 %v2565, %v2725
    %v2727 = vpop.f32.mrb[0].mxu0
    %2728 = vmatprep.mubr.bf16.mxu0 %v1929
    %2729 = vmatmul.mubr.bf16.gmra.mrb[0].mxu0 %v1928
    %v2730 = vpop.f32.mrb[0].mxu0
    %v2731 = vadd.f32 %v2570, %v2730
    %v2732 = vpop.f32.mrb[0].mxu0
    %v2733 = vpop.f32.mrb[0].mxu0
    %v2734 = vadd.f32 %v2573, %v2733
    %v2735 = vpop.f32.mrb[0].mxu0
    %2736 = vmatprep.mubr.bf16.mxu0 %v1935
    %2737 = vmatmul.mubr.bf16.gmra.mrb[0].mxu0 %v1934
    %v2738 = vpop.f32.mrb[0].mxu0
    %v2739 = vadd.f32 %v2578, %v2738
    %v2740 = vpop.f32.mrb[0].mxu0
    %v2741 = vpop.f32.mrb[0].mxu0
    %v2742 = vadd.f32 %v2581, %v2741
    %v2743 = vpop.f32.mrb[0].mxu0
    %2744 = vmatprep.mubr.bf16.mxu0 %v1941
    %2745 = vmatmul.mubr.bf16.gmra.mrb[0].mxu0 %v1940
    %v2746 = vpop.f32.mrb[0].mxu0
    %v2747 = vadd.f32 %v2586, %v2746
    %v2748 = vpop.f32.mrb[0].mxu0
    %v2749 = vpop.f32.mrb[0].mxu0
    %v2750 = vadd.f32 %v2589, %v2749
    %v2751 = vpop.f32.mrb[0].mxu0
    %2752 = vmatprep.mubr.bf16.mxu0 %v1947
    %2753 = vmatmul.mubr.bf16.gmra.mrb[0].mxu0 %v1946
    %v2754 = vpop.f32.mrb[0].mxu0
    %v2755 = vadd.f32 %v2594, %v2754
    %v2756 = vpop.f32.mrb[0].mxu0
    %v2757 = vpop.f32.mrb[0].mxu0
    %v2758 = vadd.f32 %v2597, %v2757
    %v2759 = vpop.f32.mrb[0].mxu0
    %2760 = vmatprep.mubr.bf16.mxu0 %v1953
    %2761 = vmatmul.mubr.bf16.gmra.mrb[0].mxu0 %v1952
    %v2762 = vpop.f32.mrb[0].mxu0
    %v2763 = vadd.f32 %v2602, %v2762
    %v2764 = vpop.f32.mrb[0].mxu0
    %v2765 = vpop.f32.mrb[0].mxu0
    %v2766 = vadd.f32 %v2605, %v2765
    %v2767 = vpop.f32.mrb[0].mxu0
    %2768 = vmatprep.mubr.bf16.mxu0 %v1959
    %2769 = vmatmul.mubr.bf16.gmra.mrb[0].mxu0 %v1958
    %v2770 = vpop.f32.mrb[0].mxu0
    %v2771 = vadd.f32 %v2610, %v2770
    %v2772 = vpop.f32.mrb[0].mxu0
    %v2773 = vpop.f32.mrb[0].mxu0
    %v2774 = vadd.f32 %v2613, %v2773
    %v2775 = vpop.f32.mrb[0].mxu0
    %2776 = vmatprep.mubr.bf16.mxu0 %v1965
    %2777 = vmatmul.mubr.bf16.gmra.mrb[0].mxu0 %v1964
    %v2778 = vpop.f32.mrb[0].mxu0
    %v2779 = vadd.f32 %v2618, %v2778
    %v2780 = vpop.f32.mrb[0].mxu0
    %v2781 = vpop.f32.mrb[0].mxu0
    %v2782 = vadd.f32 %v2621, %v2781
    %v2783 = vpop.f32.mrb[0].mxu0
    %2784 = vdwg.mxu0
    %v2785 = vld [vmem:[%s4] sm:$0xff]
    %v2786 = vld [vmem:[%s4 + $0x8] sm:$0xff]
    %v2787 = vld [vmem:[%s4 + $0x10] sm:$0xff]
    %v2788 = vld [vmem:[%s4 + $0x18] sm:$0xff]
    %v2789 = vld [vmem:[%s4 + $0x20] sm:$0xff]
    %v2790 = vld [vmem:[%s4 + $0x28] sm:$0xff]
    %v2791 = vld [vmem:[%s4 + $0x30] sm:$0xff]
    %v2792 = vld [vmem:[%s4 + $0x38] sm:$0xff]
    %v2793 = vld [vmem:[%s4 + $0x40] sm:$0xff]
    %v2794 = vld [vmem:[%s4 + $0x48] sm:$0xff]
    %v2795 = vld [vmem:[%s4 + $0x50] sm:$0xff]
    %v2796 = vld [vmem:[%s4 + $0x58] sm:$0xff]
    %v2797 = vld [vmem:[%s4 + $0x60] sm:$0xff]
    %v2798 = vld [vmem:[%s4 + $0x68] sm:$0xff]
    %v2799 = vld [vmem:[%s4 + $0x70] sm:$0xff]
    %v2800 = vld [vmem:[%s4 + $0x78] sm:$0xff]
    %v2801 = vld [vmem:[%s4 + $0x80] sm:$0xff]
    %v2802 = vld [vmem:[%s4 + $0x88] sm:$0xff]
    %v2803 = vld [vmem:[%s4 + $0x90] sm:$0xff]
    %v2804 = vld [vmem:[%s4 + $0x98] sm:$0xff]
    %v2805 = vld [vmem:[%s4 + $0xa0] sm:$0xff]
    %v2806 = vld [vmem:[%s4 + $0xa8] sm:$0xff]
    %v2807 = vld [vmem:[%s4 + $0xb0] sm:$0xff]
    %v2808 = vld [vmem:[%s4 + $0xb8] sm:$0xff]
    %v2809 = vld [vmem:[%s4 + $0xc0] sm:$0xff]
    %v2810 = vld [vmem:[%s4 + $0xc8] sm:$0xff]
    %v2811 = vld [vmem:[%s4 + $0xd0] sm:$0xff]
    %v2812 = vld [vmem:[%s4 + $0xd8] sm:$0xff]
    %v2813 = vld [vmem:[%s4 + $0xe0] sm:$0xff]
    %v2814 = vld [vmem:[%s4 + $0xe8] sm:$0xff]
    %v2815 = vld [vmem:[%s4 + $0xf0] sm:$0xff]
    %v2816 = vld [vmem:[%s4 + $0xf8] sm:$0xff]
    %2818 = vset.pattern.permute.xlu0 0
    %2819 = vperm.xlu0 %2818, %v2785
    %v2820 = vpop.permute.xlu0 %2819
    %2823 = vset.pattern.permute.xlu0 0
    %2824 = vperm.xlu0 %2823, %v2786
    %v2825 = vpop.permute.xlu0 %2824
    %2828 = vset.pattern.permute.xlu0 0
    %2829 = vperm.xlu0 %2828, %v2787
    %v2830 = vpop.permute.xlu0 %2829
    %2833 = vset.pattern.permute.xlu0 0
    %2834 = vperm.xlu0 %2833, %v2788
    %v2835 = vpop.permute.xlu0 %2834
    %2838 = vset.pattern.permute.xlu0 0
    %2839 = vperm.xlu0 %2838, %v2789
    %v2840 = vpop.permute.xlu0 %2839
    %2843 = vset.pattern.permute.xlu0 0
    %2844 = vperm.xlu0 %2843, %v2790
    %v2845 = vpop.permute.xlu0 %2844
    %2848 = vset.pattern.permute.xlu0 0
    %2849 = vperm.xlu0 %2848, %v2791
    %v2850 = vpop.permute.xlu0 %2849
    %2853 = vset.pattern.permute.xlu0 0
    %2854 = vperm.xlu0 %2853, %v2792
    %v2855 = vpop.permute.xlu0 %2854
    %2858 = vset.pattern.permute.xlu0 0
    %2859 = vperm.xlu0 %2858, %v2793
    %v2860 = vpop.permute.xlu0 %2859
    %2863 = vset.pattern.permute.xlu0 0
    %2864 = vperm.xlu0 %2863, %v2794
    %v2865 = vpop.permute.xlu0 %2864
    %2868 = vset.pattern.permute.xlu0 0
    %2869 = vperm.xlu0 %2868, %v2795
    %v2870 = vpop.permute.xlu0 %2869
    %2873 = vset.pattern.permute.xlu0 0
    %2874 = vperm.xlu0 %2873, %v2796
    %v2875 = vpop.permute.xlu0 %2874
    %2878 = vset.pattern.permute.xlu0 0
    %2879 = vperm.xlu0 %2878, %v2797
    %v2880 = vpop.permute.xlu0 %2879
    %2883 = vset.pattern.permute.xlu0 0
    %2884 = vperm.xlu0 %2883, %v2798
    %v2885 = vpop.permute.xlu0 %2884
    %2888 = vset.pattern.permute.xlu0 0
    %2889 = vperm.xlu0 %2888, %v2799
    %v2890 = vpop.permute.xlu0 %2889
    %2893 = vset.pattern.permute.xlu0 0
    %2894 = vperm.xlu0 %2893, %v2800
    %v2895 = vpop.permute.xlu0 %2894
    %2898 = vset.pattern.permute.xlu0 0
    %2899 = vperm.xlu0 %2898, %v2801
    %v2900 = vpop.permute.xlu0 %2899
    %2903 = vset.pattern.permute.xlu0 0
    %2904 = vperm.xlu0 %2903, %v2802
    %v2905 = vpop.permute.xlu0 %2904
    %2908 = vset.pattern.permute.xlu0 0
    %2909 = vperm.xlu0 %2908, %v2803
    %v2910 = vpop.permute.xlu0 %2909
    %2913 = vset.pattern.permute.xlu0 0
    %2914 = vperm.xlu0 %2913, %v2804
    %v2915 = vpop.permute.xlu0 %2914
    %2918 = vset.pattern.permute.xlu0 0
    %2919 = vperm.xlu0 %2918, %v2805
    %v2920 = vpop.permute.xlu0 %2919
    %2923 = vset.pattern.permute.xlu0 0
    %2924 = vperm.xlu0 %2923, %v2806
    %v2925 = vpop.permute.xlu0 %2924
    %2928 = vset.pattern.permute.xlu0 0
    %2929 = vperm.xlu0 %2928, %v2807
    %v2930 = vpop.permute.xlu0 %2929
    %2933 = vset.pattern.permute.xlu0 0
    %2934 = vperm.xlu0 %2933, %v2808
    %v2935 = vpop.permute.xlu0 %2934
    %2938 = vset.pattern.permute.xlu0 0
    %2939 = vperm.xlu0 %2938, %v2809
    %v2940 = vpop.permute.xlu0 %2939
    %2943 = vset.pattern.permute.xlu0 0
    %2944 = vperm.xlu0 %2943, %v2810
    %v2945 = vpop.permute.xlu0 %2944
    %2948 = vset.pattern.permute.xlu0 0
    %2949 = vperm.xlu0 %2948, %v2811
    %v2950 = vpop.permute.xlu0 %2949
    %2953 = vset.pattern.permute.xlu0 0
    %2954 = vperm.xlu0 %2953, %v2812
    %v2955 = vpop.permute.xlu0 %2954
    %2958 = vset.pattern.permute.xlu0 0
    %2959 = vperm.xlu0 %2958, %v2813
    %v2960 = vpop.permute.xlu0 %2959
    %2963 = vset.pattern.permute.xlu0 0
    %2964 = vperm.xlu0 %2963, %v2814
    %v2965 = vpop.permute.xlu0 %2964
    %2968 = vset.pattern.permute.xlu0 0
    %2969 = vperm.xlu0 %2968, %v2815
    %v2970 = vpop.permute.xlu0 %2969
    %2973 = vset.pattern.permute.xlu0 0
    %2974 = vperm.xlu0 %2973, %v2816
    %v2975 = vpop.permute.xlu0 %2974
    %v2977 = vadd.f32 %v2659, %v2820
    %v2978 = vadd.f32 %v2662, %v2825
    %v2979 = vadd.f32 %v2667, %v2830
    %v2980 = vadd.f32 %v2670, %v2835
    %v2981 = vadd.f32 %v2675, %v2840
    %v2982 = vadd.f32 %v2678, %v2845
    %v2983 = vadd.f32 %v2683, %v2850
    %v2984 = vadd.f32 %v2686, %v2855
    %v2985 = vadd.f32 %v2691, %v2860
    %v2986 = vadd.f32 %v2694, %v2865
    %v2987 = vadd.f32 %v2699, %v2870
    %v2988 = vadd.f32 %v2702, %v2875
    %v2989 = vadd.f32 %v2707, %v2880
    %v2990 = vadd.f32 %v2710, %v2885
    %v2991 = vadd.f32 %v2715, %v2890
    %v2992 = vadd.f32 %v2718, %v2895
    %v2993 = vadd.f32 %v2723, %v2900
    %v2994 = vadd.f32 %v2726, %v2905
    %v2995 = vadd.f32 %v2731, %v2910
    %v2996 = vadd.f32 %v2734, %v2915
    %v2997 = vadd.f32 %v2739, %v2920
    %v2998 = vadd.f32 %v2742, %v2925
    %v2999 = vadd.f32 %v2747, %v2930
    %v3000 = vadd.f32 %v2750, %v2935
    %v3001 = vadd.f32 %v2755, %v2940
    %v3002 = vadd.f32 %v2758, %v2945
    %v3003 = vadd.f32 %v2763, %v2950
    %v3004 = vadd.f32 %v2766, %v2955
    %v3005 = vadd.f32 %v2771, %v2960
    %v3006 = vadd.f32 %v2774, %v2965
    %v3007 = vadd.f32 %v2779, %v2970
    %v3008 = vadd.f32 %v2782, %v2975
    %v3009 = vmax.f32 %v2977, 0.0
    %v3010 = vmax.f32 %v2978, 0.0
    %v3011 = vmax.f32 %v2979, 0.0
    %v3012 = vmax.f32 %v2980, 0.0
    %v3013 = vmax.f32 %v2981, 0.0
    %v3014 = vmax.f32 %v2982, 0.0
    %v3015 = vmax.f32 %v2983, 0.0
    %v3016 = vmax.f32 %v2984, 0.0
    %v3017 = vmax.f32 %v2985, 0.0
    %v3018 = vmax.f32 %v2986, 0.0
    %v3019 = vmax.f32 %v2987, 0.0
    %v3020 = vmax.f32 %v2988, 0.0
    %v3021 = vmax.f32 %v2989, 0.0
    %v3022 = vmax.f32 %v2990, 0.0
    %v3023 = vmax.f32 %v2991, 0.0
    %v3024 = vmax.f32 %v2992, 0.0
    %v3025 = vmax.f32 %v2993, 0.0
    %v3026 = vmax.f32 %v2994, 0.0
    %v3027 = vmax.f32 %v2995, 0.0
    %v3028 = vmax.f32 %v2996, 0.0
    %v3029 = vmax.f32 %v2997, 0.0
    %v3030 = vmax.f32 %v2998, 0.0
    %v3031 = vmax.f32 %v2999, 0.0
    %v3032 = vmax.f32 %v3000, 0.0
    %v3033 = vmax.f32 %v3001, 0.0
    %v3034 = vmax.f32 %v3002, 0.0
    %v3035 = vmax.f32 %v3003, 0.0
    %v3036 = vmax.f32 %v3004, 0.0
    %v3037 = vmax.f32 %v3005, 0.0
    %v3038 = vmax.f32 %v3006, 0.0
    %v3039 = vmax.f32 %v3007, 0.0
    %v3040 = vmax.f32 %v3008, 0.0
    %v3041 = vld [vmem:[#allocation9] sm:$0xff]
    %v3042 = vld [vmem:[#allocation9 + $0x8] sm:$0xff]
    %v3043 = vld [vmem:[#allocation9 + $0x10] sm:$0xff]
    %v3044 = vld [vmem:[#allocation9 + $0x18] sm:$0xff]
    %v3045 = vld [vmem:[#allocation9 + $0x20] sm:$0xff]
    %v3046 = vld [vmem:[#allocation9 + $0x28] sm:$0xff]
    %v3047 = vld [vmem:[#allocation9 + $0x30] sm:$0xff]
    %v3048 = vld [vmem:[#allocation9 + $0x38] sm:$0xff]
    %v3049 = vpack.c.bf16 %v3010, %v3009
    %v3050 = vpack.c.bf16 %v3012, %v3011
    %v3051 = vpack.c.bf16 %v3014, %v3013
    %v3052 = vpack.c.bf16 %v3016, %v3015
    %v3053 = vpack.c.bf16 %v3018, %v3017
    %v3054 = vpack.c.bf16 %v3020, %v3019
    %v3055 = vpack.c.bf16 %v3022, %v3021
    %v3056 = vpack.c.bf16 %v3024, %v3023
    %v3057 = vpack.c.bf16 %v3026, %v3025
    %v3058 = vpack.c.bf16 %v3028, %v3027
    %v3059 = vpack.c.bf16 %v3030, %v3029
    %v3060 = vpack.c.bf16 %v3032, %v3031
    %v3061 = vpack.c.bf16 %v3034, %v3033
    %v3062 = vpack.c.bf16 %v3036, %v3035
    %v3063 = vpack.c.bf16 %v3038, %v3037
    %v3064 = vpack.c.bf16 %v3040, %v3039
    %v3065 = vld [vmem:[%s6] sm:$0xff]
    %v3066 = vld [vmem:[%s6 + $0x8] sm:$0xff]
    %v3067 = vld [vmem:[%s6 + $0x10] sm:$0xff]
    %v3068 = vld [vmem:[%s6 + $0x18] sm:$0xff]
    %v3069 = vld [vmem:[%s6 + $0x20] sm:$0xff]
    %v3070 = vld [vmem:[%s6 + $0x28] sm:$0xff]
    %v3071 = vld [vmem:[%s6 + $0x30] sm:$0xff]
    %v3072 = vld [vmem:[%s6 + $0x38] sm:$0xff]
    %3074 = vset.pattern.permute.xlu0 0
    %3075 = vperm.xlu0 %3074, %v3065
    %v3076 = vpop.permute.xlu0 %3075
    %3079 = vset.pattern.permute.xlu0 0
    %3080 = vperm.xlu0 %3079, %v3066
    %v3081 = vpop.permute.xlu0 %3080
    %3084 = vset.pattern.permute.xlu0 0
    %3085 = vperm.xlu0 %3084, %v3067
    %v3086 = vpop.permute.xlu0 %3085
    %3089 = vset.pattern.permute.xlu0 0
    %3090 = vperm.xlu0 %3089, %v3068
    %v3091 = vpop.permute.xlu0 %3090
    %3094 = vset.pattern.permute.xlu0 0
    %3095 = vperm.xlu0 %3094, %v3069
    %v3096 = vpop.permute.xlu0 %3095
    %3099 = vset.pattern.permute.xlu0 0
    %3100 = vperm.xlu0 %3099, %v3070
    %v3101 = vpop.permute.xlu0 %3100
    %3104 = vset.pattern.permute.xlu0 0
    %3105 = vperm.xlu0 %3104, %v3071
    %v3106 = vpop.permute.xlu0 %3105
    %3109 = vset.pattern.permute.xlu0 0
    %3110 = vperm.xlu0 %3109, %v3072
    %v3111 = vpop.permute.xlu0 %3110
    %v3121 = vunpack.c.l.b16 %v3041
    %v3122 = vunpack.c.h.b16 %v3041
    %v3123 = vunpack.c.l.b16 %v3042
    %v3124 = vunpack.c.h.b16 %v3042
    %v3125 = vunpack.c.l.b16 %v3043
    %v3126 = vunpack.c.h.b16 %v3043
    %v3127 = vunpack.c.l.b16 %v3044
    %v3128 = vunpack.c.h.b16 %v3044
    %v3129 = vunpack.c.l.b16 %v3045
    %v3130 = vunpack.c.h.b16 %v3045
    %v3131 = vunpack.c.l.b16 %v3046
    %v3132 = vunpack.c.h.b16 %v3046
    %v3133 = vunpack.c.l.b16 %v3047
    %v3134 = vunpack.c.h.b16 %v3047
    %v3135 = vunpack.c.l.b16 %v3048
    %v3136 = vunpack.c.h.b16 %v3048
    %v3137 = vpack.c.b16 %v3123, %v3121
    %v3138 = vpack.c.b16 %v3124, %v3122
    %v3139 = vpack.c.b16 %v3127, %v3125
    %v3140 = vpack.c.b16 %v3128, %v3126
    %v3141 = vpack.c.b16 %v3131, %v3129
    %v3142 = vpack.c.b16 %v3132, %v3130
    %v3143 = vpack.c.b16 %v3135, %v3133
    %v3144 = vpack.c.b16 %v3136, %v3134
    %3153 = vmatprep.subr.bf16.mxu0 0
    %3154 = vmatpush1.bf16.msra.mxu0 %v3049
    %3155 = vmatprep.subr.bf16.mxu0 0
    %3156 = vmatpush1.bf16.msra.mxu0 %v3050
    %3157 = vmatprep.subr.bf16.mxu0 0
    %3158 = vmatpush1.bf16.msra.mxu0 %v3051
    %3159 = vmatprep.subr.bf16.mxu0 0
    %3160 = vmatpush1.bf16.msra.mxu0 %v3052
    %3161 = vmatprep.subr.bf16.mxu0 0
    %3162 = vmatpush1.bf16.msra.mxu0 %v3053
    %3163 = vmatprep.subr.bf16.mxu0 0
    %3164 = vmatpush1.bf16.msra.mxu0 %v3054
    %3165 = vmatprep.subr.bf16.mxu0 0
    %3166 = vmatpush1.bf16.msra.mxu0 %v3055
    %3167 = vmatprep.subr.bf16.mxu0 0
    %3168 = vmatpush1.bf16.msra.mxu0 %v3056
    %3169 = vmatprep.subr.bf16.mxu0 0
    %3170 = vmatpush1.bf16.msra.mxu0 %v3057
    %3171 = vmatprep.subr.bf16.mxu0 0
    %3172 = vmatpush1.bf16.msra.mxu0 %v3058
    %3173 = vmatprep.subr.bf16.mxu0 0
    %3174 = vmatpush1.bf16.msra.mxu0 %v3059
    %3175 = vmatprep.subr.bf16.mxu0 0
    %3176 = vmatpush1.bf16.msra.mxu0 %v3060
    %3177 = vmatprep.subr.bf16.mxu0 0
    %3178 = vmatpush1.bf16.msra.mxu0 %v3061
    %3179 = vmatprep.subr.bf16.mxu0 0
    %3180 = vmatpush1.bf16.msra.mxu0 %v3062
    %3181 = vmatprep.subr.bf16.mxu0 0
    %3182 = vmatpush1.bf16.msra.mxu0 %v3063
    %3183 = vmatprep.subr.bf16.mxu0 0
    %3184 = vmatpush1.bf16.msra.mxu0 %v3064
    %3185 = vmatprep.mubr.bf16.mxu0 %v3138
    %3186 = vmatmul.mubr.bf16.gmra.mrb[0].mxu0 %v3137
    %v3187 = vpop.f32.mrb[0].mxu0
    %v3188 = vadd.f32 %v3076, %v3187
    %v3189 = vpop.f32.mrb[0].mxu0
    %v3190 = vpop.f32.mrb[0].mxu0
    %v3191 = vadd.f32 %v3081, %v3190
    %v3192 = vpop.f32.mrb[0].mxu0
    %3193 = vmatprep.mubr.bf16.mxu0 %v3140
    %3194 = vmatmul.mubr.bf16.gmra.mrb[0].mxu0 %v3139
    %v3195 = vpop.f32.mrb[0].mxu0
    %v3196 = vadd.f32 %v3086, %v3195
    %v3197 = vpop.f32.mrb[0].mxu0
    %v3198 = vpop.f32.mrb[0].mxu0
    %v3199 = vadd.f32 %v3091, %v3198
    %v3200 = vpop.f32.mrb[0].mxu0
    %3201 = vmatprep.mubr.bf16.mxu0 %v3142
    %3202 = vmatmul.mubr.bf16.gmra.mrb[0].mxu0 %v3141
    %v3203 = vpop.f32.mrb[0].mxu0
    %v3204 = vadd.f32 %v3096, %v3203
    %v3205 = vpop.f32.mrb[0].mxu0
    %v3206 = vpop.f32.mrb[0].mxu0
    %v3207 = vadd.f32 %v3101, %v3206
    %v3208 = vpop.f32.mrb[0].mxu0
    %3209 = vmatprep.mubr.bf16.mxu0 %v3144
    %3210 = vmatmul.mubr.bf16.gmra.mrb[0].mxu0 %v3143
    %v3211 = vpop.f32.mrb[0].mxu0
    %v3212 = vadd.f32 %v3106, %v3211
    %v3213 = vpop.f32.mrb[0].mxu0
    %v3214 = vpop.f32.mrb[0].mxu0
    %v3215 = vadd.f32 %v3111, %v3214
    %v3216 = vpop.f32.mrb[0].mxu0
    %3217 = vdwg.mxu0
    %v3218 = vmax.f32 %v3188, 0.0
    %v3219 = vmax.f32 %v3191, 0.0
    %v3220 = vmax.f32 %v3196, 0.0
    %v3221 = vmax.f32 %v3199, 0.0
    %v3222 = vmax.f32 %v3204, 0.0
    %v3223 = vmax.f32 %v3207, 0.0
    %v3224 = vmax.f32 %v3212, 0.0
    %v3225 = vmax.f32 %v3215, 0.0
    %v3226 = vld [vmem:[%s7] sm:$0xff]
    %v3227 = vld [vmem:[%s7 + $0x8] sm:$0xff]
    %v3228 = vld [vmem:[%s7 + $0x10] sm:$0xff]
    %v3229 = vld [vmem:[%s7 + $0x18] sm:$0xff]
    %v3230 = vld [vmem:[%s7 + $0x20] sm:$0xff]
    %v3231 = vld [vmem:[%s7 + $0x28] sm:$0xff]
    %v3232 = vld [vmem:[%s7 + $0x30] sm:$0xff]
    %v3233 = vld [vmem:[%s7 + $0x38] sm:$0xff]
    %3235 = vset.pattern.permute.xlu0 0
    %3236 = vperm.xlu0 %3235, %v3226
    %v3237 = vpop.permute.xlu0 %3236
    %3240 = vset.pattern.permute.xlu0 0
    %3241 = vperm.xlu0 %3240, %v3227
    %v3242 = vpop.permute.xlu0 %3241
    %3245 = vset.pattern.permute.xlu0 0
    %3246 = vperm.xlu0 %3245, %v3228
    %v3247 = vpop.permute.xlu0 %3246
    %3250 = vset.pattern.permute.xlu0 0
    %3251 = vperm.xlu0 %3250, %v3229
    %v3252 = vpop.permute.xlu0 %3251
    %3255 = vset.pattern.permute.xlu0 0
    %3256 = vperm.xlu0 %3255, %v3230
    %v3257 = vpop.permute.xlu0 %3256
    %3260 = vset.pattern.permute.xlu0 0
    %3261 = vperm.xlu0 %3260, %v3231
    %v3262 = vpop.permute.xlu0 %3261
    %3265 = vset.pattern.permute.xlu0 0
    %3266 = vperm.xlu0 %3265, %v3232
    %v3267 = vpop.permute.xlu0 %3266
    %3270 = vset.pattern.permute.xlu0 0
    %3271 = vperm.xlu0 %3270, %v3233
    %v3272 = vpop.permute.xlu0 %3271
    %v3274 = vmul.f32 %v3218, %v3237
    %v3275 = vmul.f32 %v3219, %v3242
    %v3276 = vmul.f32 %v3220, %v3247
    %v3277 = vmul.f32 %v3221, %v3252
    %v3278 = vmul.f32 %v3222, %v3257
    %v3279 = vmul.f32 %v3223, %v3262
    %v3280 = vmul.f32 %v3224, %v3267
    %v3281 = vmul.f32 %v3225, %v3272
    %v3282 = vadd.f32 %v3274, %v3275
    %v3283 = vadd.f32 %v3282, %v3276
    %v3284 = vadd.f32 %v3283, %v3277
    %v3285 = vadd.f32 %v3284, %v3278
    %v3286 = vadd.f32 %v3285, %v3279
    %v3287 = vadd.f32 %v3286, %v3280
    %v3288 = vadd.f32 %v3287, %v3281
    %v3289 = vrot.slane %v3288, 4
    %v3290 = vadd.f32 %v3288, %v3289
    %v3291 = vrot.slane %v3290, 2
    %v3292 = vadd.f32 %v3290, %v3291
    %v3293 = vrot.slane %v3292, 1
    %v3294 = vadd.f32 %v3292, %v3293
    %v3295 = vld [vmem:[#allocation2] sm:$0x1]
    %3297 = vset.pattern.permute.xlu0 0
    %3298 = vperm.xlu0 %3297, %v3295
    %v3299 = vpop.permute.xlu0 %3298
    %v3301 = vlaneseq
    %v3302 = vshrl.u32 %v3301, 7
    %v3303 = vsub.s32 0, %v3302
    %v3304 = vrot.slane %v3299, %v3303
    %v3305 = vadd.f32 %v3294, %v3304
    %3306 = vst [vmem:[#allocation11] sm:$0x1] %v3305
    // Predicated region
    $region54: #{tpu_custom_call.1} parent=1 // pred_check
      _
    $region55: #{tpu_custom_call.1} parent=1 // pred_check_branch
      %3308 = sbr.rel (0) target = $region57
    $region56: #{tpu_custom_call.1} parent=1 // pred_region
      %s3310 = ssub.s32 16, 16
      %3311 = vsyncadd [#allocation5], %s3310
      %s3313 = sshll.u32 [#allocation11], 4
      %s3314 = int_to_ptr.vmem [resolvable:$true] %s3313
      %3316 = dma.vmem_to_hbm [thread:$0]  %s3314, 16, %s9, [#allocation5]
    $region57: #{tpu_custom_call.1} parent=1 // pred_fallthru
      _
    // Predicated region
    $region58: #{tpu_custom_call.1} parent=1 // pred_check
      _
    $region59: #{tpu_custom_call.1} parent=1 // pred_check_branch
      %3318 = sbr.rel (0) target = $region61
    $region60: #{tpu_custom_call.1} parent=1 // pred_region
      %3319 = dma.done [#allocation5], 16
    $region61: #{tpu_custom_call.1} parent=1 // pred_fallthru
      _
    %3320 = vsyncpa [#allocation4], 1
    %3321 = vsyncpa [#allocation7], 1
    %3322 = vsyncpa [#allocation10], 1
    %3323 = vsyncpa [#allocation5], 1

</llo_original>
